<compile_context>
chip_gen: v5e
topology: v5e:2x2
jax: 0.10.0
libtpu: 0.0.40
codegen_flags: <defaults>
</compile_context>

<pallas_src>
import functools

import numpy as np

import jax
import jax.numpy as jnp
from jax import lax
from jax.experimental import pallas as pl
from jax.experimental.pallas import tpu as pltpu

LOG2 = 0.6931471805599453


def _shifted_softplus(x):
    # ShiftedSoftplus: softplus(x) - log(2), numerically-stable form.
    return jnp.maximum(x, 0.0) + jnp.log(1.0 + jnp.exp(-jnp.abs(x))) - LOG2


def _mask_bf16(cond):
    # bool -> f32 -> bf16. 0/1 one-hot values are exact in bf16; the f32 hop
    # keeps the cast on well-trodden Mosaic lowering paths.
    return cond.astype(jnp.float32).astype(jnp.bfloat16)


def schnet_kernel(depth, gamma,
                  x_ref, src_ref, dst_ref, dist_ref, batch_ref, mu_ref,
                  *param_and_out_refs):
    refs = list(param_and_out_refs)
    out_ref = refs.pop()                       # final positional ref = output
    emb_w, emb_b = refs[0], refs[1]
    conv_refs = refs[2:2 + 4 * depth]
    hd_w1, hd_b1, hd_w2, hd_b2 = refs[2 + 4 * depth:]

    N = x_ref.shape[0]          # padded nodes per block (lane aligned)
    E = src_ref.shape[0]        # padded edges per block
    B = out_ref.shape[0]        # padded graph slots per block
    f32, bf16 = jnp.float32, jnp.bfloat16

    # ---- embedder: Linear(in -> hidden), zero-padded lanes stay inert -----
    h = jnp.dot(x_ref[...], emb_w[...], preferred_element_type=f32) + emb_b[...]

    # ---- one-hot gather / scatter masks (exact 0/1, bf16) -----------------
    #   gather : x_j = src_oh @ h     ([E,N] x [N,H])
    #   scatter: agg = dst_oh @ msg   ([N,E] x [E,H])
    # Padded edges carry src/dst = -1, so their one-hot rows/cols are zero.
    src_oh = _mask_bf16(src_ref[...] ==
                        lax.broadcasted_iota(jnp.int32, (E, N), 1))   # [E,N]
    dst_oh = _mask_bf16(dst_ref[...] ==
                        lax.broadcasted_iota(jnp.int32, (N, E), 0))   # [N,E]
    # TODO(synk): for large graphs replace these O(E*N) dense masks with an
    # edge-tiled grid + PrefetchScalarGridSpec index-driven gather/scatter;
    # the one-hot MXU path is intended only for padded blocks of <=128 nodes.

    # ---- Gaussian radial basis expansion of distances ---------------------
    rbf = jnp.exp(-gamma * jnp.square(dist_ref[...] - mu_ref[...]))   # [E,K]

    # ---- depth x SchnetConv (CFConv) with residual -------------------------
    for l in range(depth):
        w1, b1, w2, b2 = conv_refs[4 * l: 4 * l + 4]
        filt = _shifted_softplus(
            jnp.dot(rbf, w1[...], preferred_element_type=f32) + b1[...])
        filt = jnp.dot(filt, w2[...], preferred_element_type=f32) + b2[...]  # [E,H]
        x_j = jnp.dot(src_oh, h.astype(bf16),
                      preferred_element_type=f32)                            # [E,H]
        msg = (x_j * filt).astype(bf16)                                      # [E,H]
        agg = jnp.dot(dst_oh, msg, preferred_element_type=f32)               # [N,H]
        h = h + agg                                                          # residual

    # ---- head Linear -> ShiftedSoftplus ------------------------------------
    hh = _shifted_softplus(
        jnp.dot(h, hd_w1[...], preferred_element_type=f32) + hd_b1[...])     # [N,H]

    # ---- global_add_pool commuted with the final Linear --------------------
    # out_b = (sum_{i in b} ssp(h_i W1 + b1)) W2 + n_b * b2
    pool_m = _mask_bf16(batch_ref[...] ==
                        lax.broadcasted_iota(jnp.int32, (B, N), 0))          # [B,N]
    counts = jnp.sum(pool_m.astype(f32), axis=1, keepdims=True)              # [B,1]
    pooled = jnp.dot(pool_m, hh.astype(bf16), preferred_element_type=f32)    # [B,H]
    out_ref[...] = (jnp.dot(pooled, hd_w2[...], preferred_element_type=f32)
                    + counts * hd_b2[...])                                   # [B,Fo]


# --------------------------------------------------------------------------
# host-side packing / padding helpers
# --------------------------------------------------------------------------

def _round_up(v, m):
    return ((v + m - 1) // m) * m


def _pad2d(a, rows, cols):
    a = jnp.asarray(a, jnp.float32)
    if a.ndim == 1:
        a = a.reshape(1, -1)
    out = jnp.zeros((rows, cols), jnp.float32)
    return out.at[:a.shape[0], :a.shape[1]].set(a)


def _pack_blocks(x, edge_index, dist, batch, num_graphs, graphs_per_block,
                 nodes_per_block, edges_per_block, f_in_pad):
    """Pack a PyG-style batched graph into padded per-block supergraphs."""
    x = np.asarray(x, np.float32)
    ei = np.asarray(edge_index, np.int64)
    dist = np.asarray(dist, np.float32)
    batch = np.asarray(batch, np.int64)
    n_nodes, f_in = x.shape
    n_edges = ei.shape[1]

    num_blocks = -(-num_graphs // graphs_per_block)
    blk_of_graph = np.arange(num_graphs) // graphs_per_block
    slot_of_graph = np.arange(num_graphs) % graphs_per_block

    x_blk = np.zeros((num_blocks, nodes_per_block, f_in_pad), np.float32)
    batch_blk = np.full((num_blocks, 1, nodes_per_block), -1, np.int32)
    src_blk = np.full((num_blocks, edges_per_block, 1), -1, np.int32)
    dst_blk = np.full((num_blocks, 1, edges_per_block), -1, np.int32)
    dist_blk = np.zeros((num_blocks, edges_per_block, 1), np.float32)

    node_blk = blk_of_graph[batch]          # block id of each node
    local = np.zeros(n_nodes, np.int64)     # node index local to its block
    ncount = np.zeros(num_blocks, np.int64)
    for n in range(n_nodes):
        b = node_blk[n]
        local[n] = ncount[b]
        ncount[b] += 1
    assert ncount.max() <= nodes_per_block, "nodes_per_block too small"
    x_blk[node_blk, local, :f_in] = x
    batch_blk[node_blk, 0, local] = slot_of_graph[batch]

    edge_blk = node_blk[ei[0]]
    ecount = np.zeros(num_blocks, np.int64)
    for e in range(n_edges):
        b = edge_blk[e]
        s = ecount[b]
        ecount[b] += 1
        src_blk[b, s, 0] = local[ei[0, e]]
        dst_blk[b, 0, s] = local[ei[1, e]]
        dist_blk[b, s, 0] = dist[e]
    assert ecount.max() <= edges_per_block, "edges_per_block too small"

    return (x_blk, src_blk, dst_blk, dist_blk, batch_blk,
            blk_of_graph, slot_of_graph)


# --------------------------------------------------------------------------
# forward wrapper
# --------------------------------------------------------------------------

def schnet_forward(x, edge_index, dist, batch, params, *, depth, gamma,
                   num_graphs, graphs_per_block=8, nodes_per_block=128,
                   edges_per_block=128):
    in_features = x.shape[1]
    hidden = params["emb_w"].shape[1]
    out_features = params["hd_w2"].shape[1]
    num_basis = params["mu"].shape[0]
    wnet_dim = params["conv0_w1"].shape[1]

    # lane-dense padded widths (multiples of 128 -> full MXU tiles, unmasked vst)
    f_in_p = _round_up(in_features, 128)
    hid_p = _round_up(hidden, 128)
    wnet_p = _round_up(wnet_dim, 128)
    basis_p = _round_up(num_basis, 128)
    f_out_p = _round_up(out_features, 128)
    n_p = _round_up(nodes_per_block, 128)   # node count == lane dim of masks
    e_p = _round_up(edges_per_block, 128)
    b_slot = _round_up(graphs_per_block, 8)

    (x_blk, src_blk, dst_blk, dist_blk, batch_blk,
     blk_of_graph, slot_of_graph) = _pack_blocks(
        x, edge_index, dist, batch, num_graphs, graphs_per_block,
        n_p, e_p, f_in_p)
    num_blocks = x_blk.shape[0]

    # zero-padded parameters (zero pads keep padded lanes exactly inert)
    flat_params = [_pad2d(params["emb_w"], f_in_p, hid_p),
                   _pad2d(params["emb_b"], 1, hid_p)]
    for l in range(depth):
        flat_params += [_pad2d(params[f"conv{l}_w1"], basis_p, wnet_p),
                        _pad2d(params[f"conv{l}_b1"], 1, wnet_p),
                        _pad2d(params[f"conv{l}_w2"], wnet_p, hid_p),
                        _pad2d(params[f"conv{l}_b2"], 1, hid_p)]
    flat_params += [_pad2d(params["hd_w1"], hid_p, hid_p),
                    _pad2d(params["hd_b1"], 1, hid_p),
                    _pad2d(params["hd_w2"], hid_p, f_out_p),
                    _pad2d(params["hd_b2"], 1, f_out_p)]
    # padded basis centers pushed far away -> rbf of padded basis ~ 0
    # (their w1 rows are zero anyway, so they contribute nothing).
    mu_p = jnp.full((1, basis_p), 1e6, jnp.float32).at[0, :num_basis].set(
        params["mu"].astype(jnp.float32))

    def blk_spec(*tail):
        # leading (graph-block) axis squeezed, one block per grid step
        return pl.BlockSpec((None,) + tail, lambda g: (g, 0, 0))

    def param_spec(a):
        # whole (small) parameter array resident each step
        return pl.BlockSpec(a.shape, lambda g: (0, 0))

    in_specs = ([blk_spec(n_p, f_in_p),      # x
                 blk_spec(e_p, 1),           # src
                 blk_spec(1, e_p),           # dst
                 blk_spec(e_p, 1),           # dist
                 blk_spec(1, n_p),           # batch (graph slot per node)
                 param_spec(mu_p)]
                + [param_spec(p) for p in flat_params])

    kernel = functools.partial(schnet_kernel, depth, float(gamma))
    out_blk = pl.pallas_call(
        kernel,
        out_shape=jax.ShapeDtypeStruct((num_blocks, b_slot, f_out_p),
                                       jnp.float32),
        grid=(num_blocks,),
        in_specs=in_specs,
        out_specs=blk_spec(b_slot, f_out_p),
        compiler_params=pltpu.CompilerParams(
            # graph-block axis is independent -> shards across 2 TCs on v7x
            dimension_semantics=("parallel",),
            vmem_limit_bytes=32 * 1024 * 1024),
    )(jnp.asarray(x_blk), jnp.asarray(src_blk), jnp.asarray(dst_blk),
      jnp.asarray(dist_blk), jnp.asarray(batch_blk), mu_p, *flat_params)

    # un-pad: pick each real graph's (block, slot) row and the real out lanes
    return out_blk[blk_of_graph, slot_of_graph, :out_features]


# --------------------------------------------------------------------------
# pure-JAX reference and parameter init
# --------------------------------------------------------------------------

def schnet_reference(x, edge_index, dist, batch, params, *, depth, gamma,
                     num_graphs):
    """Pure-JAX reference (same math) for correctness checking."""
    hp = jax.lax.Precision.HIGHEST
    ssp = _shifted_softplus
    h = x @ params["emb_w"] + params["emb_b"]
    src, dst = edge_index[0], edge_index[1]
    rbf = jnp.exp(-gamma * jnp.square(dist[:, None] - params["mu"][None, :]))
    for l in range(depth):
        filt = ssp(jnp.dot(rbf, params[f"conv{l}_w1"], precision=hp)
                   + params[f"conv{l}_b1"])
        filt = jnp.dot(filt, params[f"conv{l}_w2"], precision=hp) + params[f"conv{l}_b2"]
        msg = h[src] * filt
        agg = jnp.zeros_like(h).at[dst].add(msg)
        h = h + agg
    h = ssp(jnp.dot(h, params["hd_w1"], precision=hp) + params["hd_b1"])
    h = jnp.dot(h, params["hd_w2"], precision=hp) + params["hd_b2"]
    out = jnp.zeros((num_graphs, h.shape[1]), h.dtype).at[batch].add(h)
    return out


def init_params(key, in_features, hidden, out_features, depth,
                weight_net_dim, num_basis, d_min, d_max):
    """Deterministic synthetic parameter init (PyTorch-Linear-like scaling)."""
    params = {}

    def lin(key, fan_in, fan_out):
        kw, kb = jax.random.split(key)
        bound = 1.0 / jnp.sqrt(float(fan_in))
        w = jax.random.uniform(kw, (fan_in, fan_out), jnp.float32, -bound, bound)
        b = jax.random.uniform(kb, (fan_out,), jnp.float32, -bound, bound)
        return w, b

    keys = jax.random.split(key, 3 + 2 * depth)
    params["emb_w"], params["emb_b"] = lin(keys[0], in_features, hidden)
    for l in range(depth):
        params[f"conv{l}_w1"], params[f"conv{l}_b1"] = lin(
            keys[1 + 2 * l], num_basis, weight_net_dim)
        params[f"conv{l}_w2"], params[f"conv{l}_b2"] = lin(
            keys[2 + 2 * l], weight_net_dim, hidden)
    params["hd_w1"], params["hd_b1"] = lin(keys[1 + 2 * depth], hidden, hidden)
    params["hd_w2"], params["hd_b2"] = lin(keys[2 + 2 * depth], hidden, out_features)
    params["mu"] = jnp.linspace(d_min, d_max, num_basis).astype(jnp.float32)
    return params


if __name__ == "__main__":
    # Small shapes consistent with the module's forward.
    in_features, hidden, out_features = 8, 32, 4
    depth = 2
    weight_net_dim = 64          # weight_net_dims=[64]
    num_basis = 128              # module default is 300; lane-aligned 128 here
    d_min, d_max, gamma = 0.0, 30.0, 10.0
    nodes_per_graph, edges_per_graph, num_graphs = 8, 16, 4

    key = jax.random.PRNGKey(0)
    k_param, k_x, k_e, k_d = jax.random.split(key, 4)

    params = init_params(k_param, in_features, hidden, out_features, depth,
                         weight_net_dim, num_basis, d_min, d_max)

    N = nodes_per_graph * num_graphs
    E = edges_per_graph * num_graphs
    x = jax.random.normal(k_x, (N, in_features), jnp.float32)
    # random within-graph edges expressed with global node indices
    local_edges = jax.random.randint(
        k_e, (2, num_graphs, edges_per_graph), 0, nodes_per_graph, jnp.int32)
    offsets = (jnp.arange(num_graphs, dtype=jnp.int32)
               * nodes_per_graph)[None, :, None]
    edge_index = (local_edges + offsets).reshape(2, E)
    dist = jax.random.uniform(k_d, (E,), jnp.float32, 0.0, 5.0)
    batch = jnp.repeat(jnp.arange(num_graphs, dtype=jnp.int32), nodes_per_graph)

    out = schnet_forward(x, edge_index, dist, batch, params,
                         depth=depth, gamma=gamma, num_graphs=num_graphs,
                         graphs_per_block=2)
    out = jax.block_until_ready(out)
    assert out.shape == (num_graphs, out_features), out.shape

    ref = schnet_reference(x, edge_index, dist, batch, params,
                           depth=depth, gamma=gamma, num_graphs=num_graphs)
    # bf16 one-hot gather/scatter/pool path + default-precision f32 matmuls vs
    # a HIGHEST-precision reference -> slightly looser tolerance than pure-f32.
    assert jnp.allclose(out, ref, atol=2e-2, rtol=2e-2), (out, ref)

    print("KERNEL_OK")
</pallas_src>

<mosaic_0001>
module attributes {stable_mosaic.version = 11 : i64} {
  func.func @schnet_kernel(%arg0: i32, %arg1: memref<1x128x128xf32, #tpu.memory_space<vmem>>, %arg2: memref<1x128x1xi32, #tpu.memory_space<vmem>>, %arg3: memref<1x1x128xi32, #tpu.memory_space<vmem>>, %arg4: memref<1x128x1xf32, #tpu.memory_space<vmem>>, %arg5: memref<1x1x128xi32, #tpu.memory_space<vmem>>, %arg6: memref<1x128xf32, #tpu.memory_space<vmem>>, %arg7: memref<128x128xf32, #tpu.memory_space<vmem>>, %arg8: memref<1x128xf32, #tpu.memory_space<vmem>>, %arg9: memref<128x128xf32, #tpu.memory_space<vmem>>, %arg10: memref<1x128xf32, #tpu.memory_space<vmem>>, %arg11: memref<128x128xf32, #tpu.memory_space<vmem>>, %arg12: memref<1x128xf32, #tpu.memory_space<vmem>>, %arg13: memref<128x128xf32, #tpu.memory_space<vmem>>, %arg14: memref<1x128xf32, #tpu.memory_space<vmem>>, %arg15: memref<128x128xf32, #tpu.memory_space<vmem>>, %arg16: memref<1x128xf32, #tpu.memory_space<vmem>>, %arg17: memref<128x128xf32, #tpu.memory_space<vmem>>, %arg18: memref<1x128xf32, #tpu.memory_space<vmem>>, %arg19: memref<128x128xf32, #tpu.memory_space<vmem>>, %arg20: memref<1x128xf32, #tpu.memory_space<vmem>>, %arg21: memref<1x8x128xf32, #tpu.memory_space<vmem>>) attributes {dimension_semantics = [#tpu.dimension_semantics<parallel>], iteration_bounds = array<i64: 2>, scalar_prefetch = 0 : i64, scratch_operands = 0 : i64, tpu.core_type = #tpu.core_type<tc>, window_params = [{transform_indices = @transform_0, window_bounds = array<i64: 1, 128, 128>}, {transform_indices = @transform_1, window_bounds = array<i64: 1, 128, 1>}, {transform_indices = @transform_2, window_bounds = array<i64: 1, 1, 128>}, {transform_indices = @transform_3, window_bounds = array<i64: 1, 128, 1>}, {transform_indices = @transform_4, window_bounds = array<i64: 1, 1, 128>}, {pipeline_mode = #tpu.pipeline_mode<synchronous>, transform_indices = @transform_5, window_bounds = array<i64: 1, 128>}, {pipeline_mode = #tpu.pipeline_mode<synchronous>, transform_indices = @transform_6, window_bounds = array<i64: 128, 128>}, {pipeline_mode = #tpu.pipeline_mode<synchronous>, transform_indices = @transform_7, window_bounds = array<i64: 1, 128>}, {pipeline_mode = #tpu.pipeline_mode<synchronous>, transform_indices = @transform_8, window_bounds = array<i64: 128, 128>}, {pipeline_mode = #tpu.pipeline_mode<synchronous>, transform_indices = @transform_9, window_bounds = array<i64: 1, 128>}, {pipeline_mode = #tpu.pipeline_mode<synchronous>, transform_indices = @transform_10, window_bounds = array<i64: 128, 128>}, {pipeline_mode = #tpu.pipeline_mode<synchronous>, transform_indices = @transform_11, window_bounds = array<i64: 1, 128>}, {pipeline_mode = #tpu.pipeline_mode<synchronous>, transform_indices = @transform_12, window_bounds = array<i64: 128, 128>}, {pipeline_mode = #tpu.pipeline_mode<synchronous>, transform_indices = @transform_13, window_bounds = array<i64: 1, 128>}, {pipeline_mode = #tpu.pipeline_mode<synchronous>, transform_indices = @transform_14, window_bounds = array<i64: 128, 128>}, {pipeline_mode = #tpu.pipeline_mode<synchronous>, transform_indices = @transform_15, window_bounds = array<i64: 1, 128>}, {pipeline_mode = #tpu.pipeline_mode<synchronous>, transform_indices = @transform_16, window_bounds = array<i64: 128, 128>}, {pipeline_mode = #tpu.pipeline_mode<synchronous>, transform_indices = @transform_17, window_bounds = array<i64: 1, 128>}, {pipeline_mode = #tpu.pipeline_mode<synchronous>, transform_indices = @transform_18, window_bounds = array<i64: 128, 128>}, {pipeline_mode = #tpu.pipeline_mode<synchronous>, transform_indices = @transform_19, window_bounds = array<i64: 1, 128>}, {transform_indices = @transform_20, window_bounds = array<i64: 1, 8, 128>}]} {
    %c0 = arith.constant 0 : index
    %c0_0 = arith.constant 0 : index
    %c0_1 = arith.constant 0 : index
    %0 = vector.load %arg1[%c0, %c0_0, %c0_1] : memref<1x128x128xf32, #tpu.memory_space<vmem>>, vector<1x128x128xf32>
    %1 = vector.shape_cast %0 : vector<1x128x128xf32> to vector<128x128xf32>
    %c0_2 = arith.constant 0 : index
    %c0_3 = arith.constant 0 : index
    %2 = vector.load %arg7[%c0_2, %c0_3] : memref<128x128xf32, #tpu.memory_space<vmem>>, vector<128x128xf32>
    %cst = arith.constant dense<0.000000e+00> : vector<128x128xf32>
    %3 = tpu.matmul %1, %2, %cst {dimension_numbers = #tpu.dot_dimension_numbers<[1], [0], [0], [1], [0, 0, 1, 1], [], []>} : vector<128x128xf32>, vector<128x128xf32>, vector<128x128xf32> -> vector<128x128xf32>
    %c0_4 = arith.constant 0 : index
    %c0_5 = arith.constant 0 : index
    %4 = vector.load %arg8[%c0_4, %c0_5] : memref<1x128xf32, #tpu.memory_space<vmem>>, vector<1x128xf32>
    %5 = vector.broadcast %4 : vector<1x128xf32> to vector<128x128xf32>
    %6 = arith.addf %3, %5 : vector<128x128xf32>
    %c0_6 = arith.constant 0 : index
    %c0_7 = arith.constant 0 : index
    %c0_8 = arith.constant 0 : index
    %7 = vector.load %arg2[%c0_6, %c0_7, %c0_8] : memref<1x128x1xi32, #tpu.memory_space<vmem>>, vector<1x128x1xi32>
    %8 = vector.shape_cast %7 : vector<1x128x1xi32> to vector<128x1xi32>
    %9 = tpu.iota {dimensions = array<i32: 1>} : vector<128x128xi32>
    %10 = vector.broadcast %8 : vector<128x1xi32> to vector<128x128xi32>
    %11 = arith.cmpi eq, %10, %9 : vector<128x128xi32>
    %12 = arith.extui %11 : vector<128x128xi1> to vector<128x128xi32>
    %13 = arith.sitofp %12 : vector<128x128xi32> to vector<128x128xf32>
    %14 = arith.truncf %13 : vector<128x128xf32> to vector<128x128xbf16>
    %c0_9 = arith.constant 0 : index
    %c0_10 = arith.constant 0 : index
    %c0_11 = arith.constant 0 : index
    %15 = vector.load %arg3[%c0_9, %c0_10, %c0_11] : memref<1x1x128xi32, #tpu.memory_space<vmem>>, vector<1x1x128xi32>
    %16 = vector.shape_cast %15 : vector<1x1x128xi32> to vector<1x128xi32>
    %17 = tpu.iota {dimensions = array<i32: 0>} : vector<128x128xi32>
    %18 = vector.broadcast %16 : vector<1x128xi32> to vector<128x128xi32>
    %19 = arith.cmpi eq, %18, %17 : vector<128x128xi32>
    %20 = arith.extui %19 : vector<128x128xi1> to vector<128x128xi32>
    %21 = arith.sitofp %20 : vector<128x128xi32> to vector<128x128xf32>
    %22 = arith.truncf %21 : vector<128x128xf32> to vector<128x128xbf16>
    %c0_12 = arith.constant 0 : index
    %c0_13 = arith.constant 0 : index
    %c0_14 = arith.constant 0 : index
    %23 = vector.load %arg4[%c0_12, %c0_13, %c0_14] : memref<1x128x1xf32, #tpu.memory_space<vmem>>, vector<1x128x1xf32>
    %24 = vector.shape_cast %23 : vector<1x128x1xf32> to vector<128x1xf32>
    %c0_15 = arith.constant 0 : index
    %c0_16 = arith.constant 0 : index
    %25 = vector.load %arg6[%c0_15, %c0_16] : memref<1x128xf32, #tpu.memory_space<vmem>>, vector<1x128xf32>
    %26 = vector.broadcast %24 : vector<128x1xf32> to vector<128x128xf32>
    %27 = vector.broadcast %25 : vector<1x128xf32> to vector<128x128xf32>
    %28 = arith.subf %26, %27 : vector<128x128xf32>
    %29 = arith.mulf %28, %28 : vector<128x128xf32>
    %cst_17 = arith.constant -1.000000e+01 : f32
    %30 = vector.broadcast %cst_17 : f32 to vector<128x128xf32>
    %31 = arith.mulf %30, %29 : vector<128x128xf32>
    %32 = math.exp %31 : vector<128x128xf32>
    %c0_18 = arith.constant 0 : index
    %c0_19 = arith.constant 0 : index
    %33 = vector.load %arg9[%c0_18, %c0_19] : memref<128x128xf32, #tpu.memory_space<vmem>>, vector<128x128xf32>
    %cst_20 = arith.constant dense<0.000000e+00> : vector<128x128xf32>
    %34 = tpu.matmul %32, %33, %cst_20 {dimension_numbers = #tpu.dot_dimension_numbers<[1], [0], [0], [1], [0, 0, 1, 1], [], []>} : vector<128x128xf32>, vector<128x128xf32>, vector<128x128xf32> -> vector<128x128xf32>
    %c0_21 = arith.constant 0 : index
    %c0_22 = arith.constant 0 : index
    %35 = vector.load %arg10[%c0_21, %c0_22] : memref<1x128xf32, #tpu.memory_space<vmem>>, vector<1x128xf32>
    %36 = vector.broadcast %35 : vector<1x128xf32> to vector<128x128xf32>
    %37 = arith.addf %34, %36 : vector<128x128xf32>
    %cst_23 = arith.constant 0.000000e+00 : f32
    %38 = vector.broadcast %cst_23 : f32 to vector<128x128xf32>
    %39 = arith.maximumf %37, %38 : vector<128x128xf32>
    %40 = math.absf %37 : vector<128x128xf32>
    %cst_24 = arith.constant 0.000000e+00 : f32
    %41 = vector.broadcast %cst_24 : f32 to vector<128x128xf32>
    %42 = arith.subf %41, %40 : vector<128x128xf32>
    %43 = math.exp %42 : vector<128x128xf32>
    %cst_25 = arith.constant 1.000000e+00 : f32
    %44 = vector.broadcast %cst_25 : f32 to vector<128x128xf32>
    %45 = arith.addf %44, %43 : vector<128x128xf32>
    %46 = math.log %45 : vector<128x128xf32>
    %47 = arith.addf %39, %46 : vector<128x128xf32>
    %cst_26 = arith.constant 0.693147182 : f32
    %48 = vector.broadcast %cst_26 : f32 to vector<128x128xf32>
    %49 = arith.subf %47, %48 : vector<128x128xf32>
    %c0_27 = arith.constant 0 : index
    %c0_28 = arith.constant 0 : index
    %50 = vector.load %arg11[%c0_27, %c0_28] : memref<128x128xf32, #tpu.memory_space<vmem>>, vector<128x128xf32>
    %cst_29 = arith.constant dense<0.000000e+00> : vector<128x128xf32>
    %51 = tpu.matmul %49, %50, %cst_29 {dimension_numbers = #tpu.dot_dimension_numbers<[1], [0], [0], [1], [0, 0, 1, 1], [], []>} : vector<128x128xf32>, vector<128x128xf32>, vector<128x128xf32> -> vector<128x128xf32>
    %c0_30 = arith.constant 0 : index
    %c0_31 = arith.constant 0 : index
    %52 = vector.load %arg12[%c0_30, %c0_31] : memref<1x128xf32, #tpu.memory_space<vmem>>, vector<1x128xf32>
    %53 = vector.broadcast %52 : vector<1x128xf32> to vector<128x128xf32>
    %54 = arith.addf %51, %53 : vector<128x128xf32>
    %55 = arith.truncf %6 : vector<128x128xf32> to vector<128x128xbf16>
    %cst_32 = arith.constant dense<0.000000e+00> : vector<128x128xf32>
    %56 = tpu.matmul %14, %55, %cst_32 {dimension_numbers = #tpu.dot_dimension_numbers<[1], [0], [0], [1], [0, 0, 1, 1], [], []>} : vector<128x128xbf16>, vector<128x128xbf16>, vector<128x128xf32> -> vector<128x128xf32>
    %57 = arith.mulf %56, %54 : vector<128x128xf32>
    %58 = arith.truncf %57 : vector<128x128xf32> to vector<128x128xbf16>
    %cst_33 = arith.constant dense<0.000000e+00> : vector<128x128xf32>
    %59 = tpu.matmul %22, %58, %cst_33 {dimension_numbers = #tpu.dot_dimension_numbers<[1], [0], [0], [1], [0, 0, 1, 1], [], []>} : vector<128x128xbf16>, vector<128x128xbf16>, vector<128x128xf32> -> vector<128x128xf32>
    %60 = arith.addf %6, %59 : vector<128x128xf32>
    %c0_34 = arith.constant 0 : index
    %c0_35 = arith.constant 0 : index
    %61 = vector.load %arg13[%c0_34, %c0_35] : memref<128x128xf32, #tpu.memory_space<vmem>>, vector<128x128xf32>
    %cst_36 = arith.constant dense<0.000000e+00> : vector<128x128xf32>
    %62 = tpu.matmul %32, %61, %cst_36 {dimension_numbers = #tpu.dot_dimension_numbers<[1], [0], [0], [1], [0, 0, 1, 1], [], []>} : vector<128x128xf32>, vector<128x128xf32>, vector<128x128xf32> -> vector<128x128xf32>
    %c0_37 = arith.constant 0 : index
    %c0_38 = arith.constant 0 : index
    %63 = vector.load %arg14[%c0_37, %c0_38] : memref<1x128xf32, #tpu.memory_space<vmem>>, vector<1x128xf32>
    %64 = vector.broadcast %63 : vector<1x128xf32> to vector<128x128xf32>
    %65 = arith.addf %62, %64 : vector<128x128xf32>
    %cst_39 = arith.constant 0.000000e+00 : f32
    %66 = vector.broadcast %cst_39 : f32 to vector<128x128xf32>
    %67 = arith.maximumf %65, %66 : vector<128x128xf32>
    %68 = math.absf %65 : vector<128x128xf32>
    %cst_40 = arith.constant 0.000000e+00 : f32
    %69 = vector.broadcast %cst_40 : f32 to vector<128x128xf32>
    %70 = arith.subf %69, %68 : vector<128x128xf32>
    %71 = math.exp %70 : vector<128x128xf32>
    %cst_41 = arith.constant 1.000000e+00 : f32
    %72 = vector.broadcast %cst_41 : f32 to vector<128x128xf32>
    %73 = arith.addf %72, %71 : vector<128x128xf32>
    %74 = math.log %73 : vector<128x128xf32>
    %75 = arith.addf %67, %74 : vector<128x128xf32>
    %cst_42 = arith.constant 0.693147182 : f32
    %76 = vector.broadcast %cst_42 : f32 to vector<128x128xf32>
    %77 = arith.subf %75, %76 : vector<128x128xf32>
    %c0_43 = arith.constant 0 : index
    %c0_44 = arith.constant 0 : index
    %78 = vector.load %arg15[%c0_43, %c0_44] : memref<128x128xf32, #tpu.memory_space<vmem>>, vector<128x128xf32>
    %cst_45 = arith.constant dense<0.000000e+00> : vector<128x128xf32>
    %79 = tpu.matmul %77, %78, %cst_45 {dimension_numbers = #tpu.dot_dimension_numbers<[1], [0], [0], [1], [0, 0, 1, 1], [], []>} : vector<128x128xf32>, vector<128x128xf32>, vector<128x128xf32> -> vector<128x128xf32>
    %c0_46 = arith.constant 0 : index
    %c0_47 = arith.constant 0 : index
    %80 = vector.load %arg16[%c0_46, %c0_47] : memref<1x128xf32, #tpu.memory_space<vmem>>, vector<1x128xf32>
    %81 = vector.broadcast %80 : vector<1x128xf32> to vector<128x128xf32>
    %82 = arith.addf %79, %81 : vector<128x128xf32>
    %83 = arith.truncf %60 : vector<128x128xf32> to vector<128x128xbf16>
    %cst_48 = arith.constant dense<0.000000e+00> : vector<128x128xf32>
    %84 = tpu.matmul %14, %83, %cst_48 {dimension_numbers = #tpu.dot_dimension_numbers<[1], [0], [0], [1], [0, 0, 1, 1], [], []>} : vector<128x128xbf16>, vector<128x128xbf16>, vector<128x128xf32> -> vector<128x128xf32>
    %85 = arith.mulf %84, %82 : vector<128x128xf32>
    %86 = arith.truncf %85 : vector<128x128xf32> to vector<128x128xbf16>
    %cst_49 = arith.constant dense<0.000000e+00> : vector<128x128xf32>
    %87 = tpu.matmul %22, %86, %cst_49 {dimension_numbers = #tpu.dot_dimension_numbers<[1], [0], [0], [1], [0, 0, 1, 1], [], []>} : vector<128x128xbf16>, vector<128x128xbf16>, vector<128x128xf32> -> vector<128x128xf32>
    %88 = arith.addf %60, %87 : vector<128x128xf32>
    %c0_50 = arith.constant 0 : index
    %c0_51 = arith.constant 0 : index
    %89 = vector.load %arg17[%c0_50, %c0_51] : memref<128x128xf32, #tpu.memory_space<vmem>>, vector<128x128xf32>
    %cst_52 = arith.constant dense<0.000000e+00> : vector<128x128xf32>
    %90 = tpu.matmul %88, %89, %cst_52 {dimension_numbers = #tpu.dot_dimension_numbers<[1], [0], [0], [1], [0, 0, 1, 1], [], []>} : vector<128x128xf32>, vector<128x128xf32>, vector<128x128xf32> -> vector<128x128xf32>
    %c0_53 = arith.constant 0 : index
    %c0_54 = arith.constant 0 : index
    %91 = vector.load %arg18[%c0_53, %c0_54] : memref<1x128xf32, #tpu.memory_space<vmem>>, vector<1x128xf32>
    %92 = vector.broadcast %91 : vector<1x128xf32> to vector<128x128xf32>
    %93 = arith.addf %90, %92 : vector<128x128xf32>
    %cst_55 = arith.constant 0.000000e+00 : f32
    %94 = vector.broadcast %cst_55 : f32 to vector<128x128xf32>
    %95 = arith.maximumf %93, %94 : vector<128x128xf32>
    %96 = math.absf %93 : vector<128x128xf32>
    %cst_56 = arith.constant 0.000000e+00 : f32
    %97 = vector.broadcast %cst_56 : f32 to vector<128x128xf32>
    %98 = arith.subf %97, %96 : vector<128x128xf32>
    %99 = math.exp %98 : vector<128x128xf32>
    %cst_57 = arith.constant 1.000000e+00 : f32
    %100 = vector.broadcast %cst_57 : f32 to vector<128x128xf32>
    %101 = arith.addf %100, %99 : vector<128x128xf32>
    %102 = math.log %101 : vector<128x128xf32>
    %103 = arith.addf %95, %102 : vector<128x128xf32>
    %cst_58 = arith.constant 0.693147182 : f32
    %104 = vector.broadcast %cst_58 : f32 to vector<128x128xf32>
    %105 = arith.subf %103, %104 : vector<128x128xf32>
    %c0_59 = arith.constant 0 : index
    %c0_60 = arith.constant 0 : index
    %c0_61 = arith.constant 0 : index
    %106 = vector.load %arg5[%c0_59, %c0_60, %c0_61] : memref<1x1x128xi32, #tpu.memory_space<vmem>>, vector<1x1x128xi32>
    %107 = vector.shape_cast %106 : vector<1x1x128xi32> to vector<1x128xi32>
    %108 = tpu.iota {dimensions = array<i32: 0>} : vector<8x128xi32>
    %109 = vector.broadcast %107 : vector<1x128xi32> to vector<8x128xi32>
    %110 = arith.cmpi eq, %109, %108 : vector<8x128xi32>
    %111 = arith.extui %110 : vector<8x128xi1> to vector<8x128xi32>
    %112 = arith.sitofp %111 : vector<8x128xi32> to vector<8x128xf32>
    %113 = arith.truncf %112 : vector<8x128xf32> to vector<8x128xbf16>
    %114 = arith.extf %113 : vector<8x128xbf16> to vector<8x128xf32>
    %cst_62 = arith.constant dense<0.000000e+00> : vector<8xf32>
    %115 = vector.multi_reduction <add>, %114, %cst_62 [1] : vector<8x128xf32> to vector<8xf32>
    %116 = vector.shape_cast %115 : vector<8xf32> to vector<8x1xf32>
    %117 = arith.truncf %105 : vector<128x128xf32> to vector<128x128xbf16>
    %cst_63 = arith.constant dense<0.000000e+00> : vector<8x128xf32>
    %118 = tpu.matmul %113, %117, %cst_63 {dimension_numbers = #tpu.dot_dimension_numbers<[1], [0], [0], [1], [0, 0, 1, 1], [], []>} : vector<8x128xbf16>, vector<128x128xbf16>, vector<8x128xf32> -> vector<8x128xf32>
    %c0_64 = arith.constant 0 : index
    %c0_65 = arith.constant 0 : index
    %119 = vector.load %arg19[%c0_64, %c0_65] : memref<128x128xf32, #tpu.memory_space<vmem>>, vector<128x128xf32>
    %cst_66 = arith.constant dense<0.000000e+00> : vector<8x128xf32>
    %120 = tpu.matmul %118, %119, %cst_66 {dimension_numbers = #tpu.dot_dimension_numbers<[1], [0], [0], [1], [0, 0, 1, 1], [], []>} : vector<8x128xf32>, vector<128x128xf32>, vector<8x128xf32> -> vector<8x128xf32>
    %c0_67 = arith.constant 0 : index
    %c0_68 = arith.constant 0 : index
    %121 = vector.load %arg20[%c0_67, %c0_68] : memref<1x128xf32, #tpu.memory_space<vmem>>, vector<1x128xf32>
    %122 = vector.broadcast %116 : vector<8x1xf32> to vector<8x128xf32>
    %123 = vector.broadcast %121 : vector<1x128xf32> to vector<8x128xf32>
    %124 = arith.mulf %122, %123 : vector<8x128xf32>
    %125 = arith.addf %120, %124 : vector<8x128xf32>
    %c0_69 = arith.constant 0 : index
    %c0_70 = arith.constant 0 : index
    %c0_71 = arith.constant 0 : index
    %126 = vector.load %arg21[%c0_69, %c0_70, %c0_71] : memref<1x8x128xf32, #tpu.memory_space<vmem>>, vector<1x8x128xf32>
    %127 = vector.shape_cast %126 : vector<1x8x128xf32> to vector<8x128xf32>
    %128 = vector.shape_cast %125 : vector<8x128xf32> to vector<1x8x128xf32>
    tpu.vector_store %arg21[%c0_69, %c0_70, %c0_71], %128 {strides = array<i32>} : memref<1x8x128xf32, #tpu.memory_space<vmem>>, vector<1x8x128xf32>,
    return
  }
  func.func @transform_0(%arg0: i32) -> (i32, i32, i32) {
    %c0_i32 = arith.constant 0 : i32
    %c0_i32_0 = arith.constant 0 : i32
    %c0_i32_1 = arith.constant 0 : i32
    return %arg0, %c0_i32, %c0_i32_0 : i32, i32, i32
  }
  func.func @transform_1(%arg0: i32) -> (i32, i32, i32) {
    %c0_i32 = arith.constant 0 : i32
    %c0_i32_0 = arith.constant 0 : i32
    %c0_i32_1 = arith.constant 0 : i32
    return %arg0, %c0_i32, %c0_i32_0 : i32, i32, i32
  }
  func.func @transform_2(%arg0: i32) -> (i32, i32, i32) {
    %c0_i32 = arith.constant 0 : i32
    %c0_i32_0 = arith.constant 0 : i32
    %c0_i32_1 = arith.constant 0 : i32
    return %arg0, %c0_i32, %c0_i32_0 : i32, i32, i32
  }
  func.func @transform_3(%arg0: i32) -> (i32, i32, i32) {
    %c0_i32 = arith.constant 0 : i32
    %c0_i32_0 = arith.constant 0 : i32
    %c0_i32_1 = arith.constant 0 : i32
    return %arg0, %c0_i32, %c0_i32_0 : i32, i32, i32
  }
  func.func @transform_4(%arg0: i32) -> (i32, i32, i32) {
    %c0_i32 = arith.constant 0 : i32
    %c0_i32_0 = arith.constant 0 : i32
    %c0_i32_1 = arith.constant 0 : i32
    return %arg0, %c0_i32, %c0_i32_0 : i32, i32, i32
  }
  func.func @transform_5(%arg0: i32) -> (i32, i32) {
    %c0_i32 = arith.constant 0 : i32
    %c0_i32_0 = arith.constant 0 : i32
    %c0_i32_1 = arith.constant 0 : i32
    return %c0_i32, %c0_i32_0 : i32, i32
  }
  func.func @transform_6(%arg0: i32) -> (i32, i32) {
    %c0_i32 = arith.constant 0 : i32
    %c0_i32_0 = arith.constant 0 : i32
    %c0_i32_1 = arith.constant 0 : i32
    return %c0_i32, %c0_i32_0 : i32, i32
  }
  func.func @transform_7(%arg0: i32) -> (i32, i32) {
    %c0_i32 = arith.constant 0 : i32
    %c0_i32_0 = arith.constant 0 : i32
    %c0_i32_1 = arith.constant 0 : i32
    return %c0_i32, %c0_i32_0 : i32, i32
  }
  func.func @transform_8(%arg0: i32) -> (i32, i32) {
    %c0_i32 = arith.constant 0 : i32
    %c0_i32_0 = arith.constant 0 : i32
    %c0_i32_1 = arith.constant 0 : i32
    return %c0_i32, %c0_i32_0 : i32, i32
  }
  func.func @transform_9(%arg0: i32) -> (i32, i32) {
    %c0_i32 = arith.constant 0 : i32
    %c0_i32_0 = arith.constant 0 : i32
    %c0_i32_1 = arith.constant 0 : i32
    return %c0_i32, %c0_i32_0 : i32, i32
  }
  func.func @transform_10(%arg0: i32) -> (i32, i32) {
    %c0_i32 = arith.constant 0 : i32
    %c0_i32_0 = arith.constant 0 : i32
    %c0_i32_1 = arith.constant 0 : i32
    return %c0_i32, %c0_i32_0 : i32, i32
  }
  func.func @transform_11(%arg0: i32) -> (i32, i32) {
    %c0_i32 = arith.constant 0 : i32
    %c0_i32_0 = arith.constant 0 : i32
    %c0_i32_1 = arith.constant 0 : i32
    return %c0_i32, %c0_i32_0 : i32, i32
  }
  func.func @transform_12(%arg0: i32) -> (i32, i32) {
    %c0_i32 = arith.constant 0 : i32
    %c0_i32_0 = arith.constant 0 : i32
    %c0_i32_1 = arith.constant 0 : i32
    return %c0_i32, %c0_i32_0 : i32, i32
  }
  func.func @transform_13(%arg0: i32) -> (i32, i32) {
    %c0_i32 = arith.constant 0 : i32
    %c0_i32_0 = arith.constant 0 : i32
    %c0_i32_1 = arith.constant 0 : i32
    return %c0_i32, %c0_i32_0 : i32, i32
  }
  func.func @transform_14(%arg0: i32) -> (i32, i32) {
    %c0_i32 = arith.constant 0 : i32
    %c0_i32_0 = arith.constant 0 : i32
    %c0_i32_1 = arith.constant 0 : i32
    return %c0_i32, %c0_i32_0 : i32, i32
  }
  func.func @transform_15(%arg0: i32) -> (i32, i32) {
    %c0_i32 = arith.constant 0 : i32
    %c0_i32_0 = arith.constant 0 : i32
    %c0_i32_1 = arith.constant 0 : i32
    return %c0_i32, %c0_i32_0 : i32, i32
  }
  func.func @transform_16(%arg0: i32) -> (i32, i32) {
    %c0_i32 = arith.constant 0 : i32
    %c0_i32_0 = arith.constant 0 : i32
    %c0_i32_1 = arith.constant 0 : i32
    return %c0_i32, %c0_i32_0 : i32, i32
  }
  func.func @transform_17(%arg0: i32) -> (i32, i32) {
    %c0_i32 = arith.constant 0 : i32
    %c0_i32_0 = arith.constant 0 : i32
    %c0_i32_1 = arith.constant 0 : i32
    return %c0_i32, %c0_i32_0 : i32, i32
  }
  func.func @transform_18(%arg0: i32) -> (i32, i32) {
    %c0_i32 = arith.constant 0 : i32
    %c0_i32_0 = arith.constant 0 : i32
    %c0_i32_1 = arith.constant 0 : i32
    return %c0_i32, %c0_i32_0 : i32, i32
  }
  func.func @transform_19(%arg0: i32) -> (i32, i32) {
    %c0_i32 = arith.constant 0 : i32
    %c0_i32_0 = arith.constant 0 : i32
    %c0_i32_1 = arith.constant 0 : i32
    return %c0_i32, %c0_i32_0 : i32, i32
  }
  func.func @transform_20(%arg0: i32) -> (i32, i32, i32) {
    %c0_i32 = arith.constant 0 : i32
    %c0_i32_0 = arith.constant 0 : i32
    %c0_i32_1 = arith.constant 0 : i32
    return %arg0, %c0_i32, %c0_i32_0 : i32, i32, i32
  }
}

</mosaic_0001>

<llo_original>
// kernel: tpu_custom_call.1
$region0: #{tpu_custom_call.1}
  #allocation0 [shape = 'u32[]', space=smem, size = 0x4, offset = 0x4, fixed_abs, tag = 'smem constant byte address 0x4 - core index']
  #allocation1 [shape = 'u32[72,128]{1,0:T(1,128)}', space=vmem, size = 0x9000, scoped, tag = 'internal scratch']
  %s0 = inlined_call_operand.vmem [shape: f32[2,128,128], index: 0, kind: input, shape index: {}]
  %s1 = inlined_call_operand.vmem [shape: s32[2,128,1], index: 1, kind: input, shape index: {}]
  %s2 = inlined_call_operand.vmem [shape: s32[2,1,128], index: 2, kind: input, shape index: {}]
  %s3 = inlined_call_operand.vmem [shape: f32[2,128,1], index: 3, kind: input, shape index: {}]
  %s4 = inlined_call_operand.hbm [shape: s32[2,1,128], index: 4, kind: input, shape index: {}]
  %s5 = inlined_call_operand.hbm [shape: f32[1,128], index: 5, kind: input, shape index: {}]
  %s6 = inlined_call_operand.vmem [shape: f32[128,128], index: 6, kind: input, shape index: {}]
  %s7 = inlined_call_operand.vmem [shape: f32[1,128], index: 7, kind: input, shape index: {}]
  %s8 = inlined_call_operand.vmem [shape: f32[128,128], index: 8, kind: input, shape index: {}]
  %s9 = inlined_call_operand.vmem [shape: f32[1,128], index: 9, kind: input, shape index: {}]
  %s10 = inlined_call_operand.hbm [shape: f32[128,128], index: 10, kind: input, shape index: {}]
  %s11 = inlined_call_operand.vmem [shape: f32[1,128], index: 11, kind: input, shape index: {}]
  %s12 = inlined_call_operand.hbm [shape: f32[128,128], index: 12, kind: input, shape index: {}]
  %s13 = inlined_call_operand.vmem [shape: f32[1,128], index: 13, kind: input, shape index: {}]
  %s14 = inlined_call_operand.hbm [shape: f32[128,128], index: 14, kind: input, shape index: {}]
  %s15 = inlined_call_operand.vmem [shape: f32[1,128], index: 15, kind: input, shape index: {}]
  %s16 = inlined_call_operand.hbm [shape: f32[128,128], index: 16, kind: input, shape index: {}]
  %s17 = inlined_call_operand.vmem [shape: f32[1,128], index: 17, kind: input, shape index: {}]
  %s18 = inlined_call_operand.hbm [shape: f32[128,128], index: 18, kind: input, shape index: {}]
  %s19 = inlined_call_operand.vmem [shape: f32[1,128], index: 19, kind: input, shape index: {}]
  %s20 = inlined_call_operand.hbm [shape: f32[2,8,128], index: 20, kind: output, shape index: {}]
  %s21 = sld [smem:[#allocation0]]
  $region141: #{tpu_custom_call.1} parent=0
    _
  %s23 = ssub.s32 1, %s21
  %s24 = scalar_select 0, %s23, %s21
  $region1: #{tpu_custom_call.1} parent=0
    #allocation2 [shape = 'u8[1024]{0}', space=vmem, size = 0x400, scoped, tag = 'input window, operand 4']
    #allocation3 [shape = 's32[2]{0}', space=sflag, size = 0x8, scoped, tag = 'scoped memory for tpu_custom_call.1']
    #allocation4 [shape = 's32[2]{0}', space=sflag, size = 0x8, scoped, tag = 'scoped memory for tpu_custom_call.1']
    #allocation5 [shape = 'u8[512]{0}', space=vmem, size = 0x400, scoped, tag = 'input window, operand 5, single buffered']
    #allocation6 [shape = 's32[1]{0}', space=sflag, size = 0x4, scoped, tag = 'scoped memory for tpu_custom_call.1']
    #allocation7 [shape = 'u8[65536]{0}', space=vmem, size = 0x10000, scoped, tag = 'input window, operand 10, single buffered']
    #allocation8 [shape = 'u8[65536]{0}', space=vmem, size = 0x10000, scoped, tag = 'input window, operand 12, single buffered']
    #allocation9 [shape = 's32[1]{0}', space=sflag, size = 0x4, scoped, tag = 'scoped memory for tpu_custom_call.1']
    #allocation10 [shape = 'u8[65536]{0}', space=vmem, size = 0x10000, scoped, tag = 'input window, operand 14, single buffered']
    #allocation11 [shape = 'u8[65536]{0}', space=vmem, size = 0x10000, scoped, tag = 'input window, operand 16, single buffered']
    #allocation12 [shape = 's32[1]{0}', space=sflag, size = 0x4, scoped, tag = 'scoped memory for tpu_custom_call.1']
    #allocation13 [shape = 'u8[65536]{0}', space=vmem, size = 0x10000, scoped, tag = 'input window, operand 18, single buffered']
    #allocation14 [shape = 'u8[8192]{0}', space=vmem, size = 0x2000, scoped, tag = 'output window, operand 0']
    %25 = vsyncpa [#allocation3], 0
    %s26 = scalar_lea.sflag [#allocation3], 1
    %27 = vsyncpa %s26, 0
    %28 = vsyncpa [#allocation6], 0
    %29 = vsyncpa [#allocation9], 0
    %30 = vsyncpa [#allocation12], 0
    %31 = vsyncpa [#allocation4], 0
    %s32 = scalar_lea.sflag [#allocation4], 1
    %33 = vsyncpa %s32, 0
    loop: start=0, step=1, limit=4
    $region2: #{tpu_custom_call.1} parent=1 // loop_pre_header
      _
    $region3: #{tpu_custom_call.1} parent=1 // loop_header
      %s35 = sphi 0, %s39
      %p36 = scmp.ge.s32.totalorder %s35, 4
      %s45 = sphi 0, %s47
      %s48 = sphi 0, %s45
      %s49 = sphi 0, %s48
      %s65 = sphi 0, %s49
      %s71 = sphi 0, %s73
      %s74 = sphi 0, %s71
      %s75 = sphi 0, %s74
      %s91 = sphi 0, %s75
      %s97 = sphi 0, %s99
      %s100 = sphi 0, %s97
      %s101 = sphi 0, %s100
      %s117 = sphi 0, %s101
      %s123 = sphi 0, %s125
      %s126 = sphi 0, %s123
      %s127 = sphi 0, %s126
      %s143 = sphi 0, %s127
      %s149 = sphi 0, %s151
      %s152 = sphi 0, %s149
      %s153 = sphi 0, %s152
      %s169 = sphi 0, %s153
      %s173 = sphi 0, %s173
      %s175 = sphi 0, %s173
      %s176 = sphi 0, %s175
      %s190 = sphi 0, %s176
      %s194 = sphi 0, %s194
      %s196 = sphi 0, %s194
      %s197 = sphi 0, %s196
      %s211 = sphi 0, %s197
      %s215 = sphi 0, %s215
      %s217 = sphi 0, %s215
      %s218 = sphi 0, %s217
      %s232 = sphi 0, %s218
      %s236 = sphi 0, %s236
      %s238 = sphi 0, %s236
      %s239 = sphi 0, %s238
      %s253 = sphi 0, %s239
      %s257 = sphi 0, %s257
      %s259 = sphi 0, %s257
      %s260 = sphi 0, %s259
      %s274 = sphi 0, %s260
      %s278 = sphi 0, %s278
      %s280 = sphi 0, %s278
      %s281 = sphi 0, %s280
      %s295 = sphi 0, %s281
      %s299 = sphi 0, %s299
      %s301 = sphi 0, %s299
      %s302 = sphi 0, %s301
      %s316 = sphi 0, %s302
      %s320 = sphi 0, %s320
      %s322 = sphi 0, %s320
      %s323 = sphi 0, %s322
      %s337 = sphi 0, %s323
      %s341 = sphi 0, %s341
      %s343 = sphi 0, %s341
      %s344 = sphi 0, %s343
      %s358 = sphi 0, %s344
      %s362 = sphi 0, %s362
      %s364 = sphi 0, %s362
      %s365 = sphi 0, %s364
      %s379 = sphi 0, %s365
      %s383 = sphi 0, %s383
      %s385 = sphi 0, %s383
      %s386 = sphi 0, %s385
      %s400 = sphi 0, %s386
      %s404 = sphi 0, %s404
      %s406 = sphi 0, %s404
      %s407 = sphi 0, %s406
      %s421 = sphi 0, %s407
      %s425 = sphi 0, %s425
      %s427 = sphi 0, %s425
      %s428 = sphi 0, %s427
      %s442 = sphi 0, %s428
      %s446 = sphi 0, %s446
      %s448 = sphi 0, %s446
      %s449 = sphi 0, %s448
      %s463 = sphi 0, %s449
      %s467 = sphi 0, %s467
      %s469 = sphi 0, %s467
      %s470 = sphi 0, %s469
      %s484 = sphi 0, %s470
      %s490 = sphi 0, %s492
      %s493 = sphi 0, %s490
      %s494 = sphi 0, %s493
      %s510 = sphi 0, %s494
    $region4: #{tpu_custom_call.1} parent=1 // loop_header_branch
      %38 = sbr.rel (%p36) target = $region8
    $region5: #{tpu_custom_call.1} parent=1 // loop_body
      %s40 = ssub.s32 %s35, 1
      %s41 = ssub.s32 %s35, 2
      %s42 = sadd.s32 %s35, 1
      %s43 = ssub.s32 %s35, %s42
      %p44 = scmp.eq.s32.totalorder %s43, 0
      %s46 = sadd.s32 %s45, 1
      %s47 = scalar_select %p44, %s45, %s46
      %p50 = pneg %p44
      %p51 = scmp.eq.s32.totalorder %s35, 1
      %p52 = por %p50, %p51
      %p53 = scmp.ne.s32.totalorder %s45, %s48
      %p54 = scmp.eq.s32.totalorder %s35, 0
      %p55 = por %p53, %p54
      %p56 = scmp.ne.s32.totalorder %s45, %s48
      %p57 = scmp.eq.s32.totalorder %s40, 1
      %p58 = por %p56, %p57
      %p59 = scmp.ne.s32.totalorder %s48, %s49
      %p60 = scmp.eq.s32.totalorder %s40, 0
      %p61 = por %p59, %p60
      %p62 = scmp.ne.s32.totalorder %s48, %s49
      %p63 = scmp.eq.s32.totalorder %s41, 1
      %p64 = por %p62, %p63
      %p66 = scmp.ne.s32.totalorder %s49, %s65
      %p67 = scmp.eq.s32.totalorder %s41, 0
      %p68 = por %p66, %p67
      %s69 = ssub.s32 %s35, %s42
      %p70 = scmp.eq.s32.totalorder %s69, 0
      %s72 = sadd.s32 %s71, 1
      %s73 = scalar_select %p70, %s71, %s72
      %p76 = pneg %p70
      %p77 = scmp.eq.s32.totalorder %s35, 1
      %p78 = por %p76, %p77
      %p79 = scmp.ne.s32.totalorder %s71, %s74
      %p80 = scmp.eq.s32.totalorder %s35, 0
      %p81 = por %p79, %p80
      %p82 = scmp.ne.s32.totalorder %s71, %s74
      %p83 = scmp.eq.s32.totalorder %s40, 1
      %p84 = por %p82, %p83
      %p85 = scmp.ne.s32.totalorder %s74, %s75
      %p86 = scmp.eq.s32.totalorder %s40, 0
      %p87 = por %p85, %p86
      %p88 = scmp.ne.s32.totalorder %s74, %s75
      %p89 = scmp.eq.s32.totalorder %s41, 1
      %p90 = por %p88, %p89
      %p92 = scmp.ne.s32.totalorder %s75, %s91
      %p93 = scmp.eq.s32.totalorder %s41, 0
      %p94 = por %p92, %p93
      %s95 = ssub.s32 %s35, %s42
      %p96 = scmp.eq.s32.totalorder %s95, 0
      %s98 = sadd.s32 %s97, 1
      %s99 = scalar_select %p96, %s97, %s98
      %p102 = pneg %p96
      %p103 = scmp.eq.s32.totalorder %s35, 1
      %p104 = por %p102, %p103
      %p105 = scmp.ne.s32.totalorder %s97, %s100
      %p106 = scmp.eq.s32.totalorder %s35, 0
      %p107 = por %p105, %p106
      %p108 = scmp.ne.s32.totalorder %s97, %s100
      %p109 = scmp.eq.s32.totalorder %s40, 1
      %p110 = por %p108, %p109
      %p111 = scmp.ne.s32.totalorder %s100, %s101
      %p112 = scmp.eq.s32.totalorder %s40, 0
      %p113 = por %p111, %p112
      %p114 = scmp.ne.s32.totalorder %s100, %s101
      %p115 = scmp.eq.s32.totalorder %s41, 1
      %p116 = por %p114, %p115
      %p118 = scmp.ne.s32.totalorder %s101, %s117
      %p119 = scmp.eq.s32.totalorder %s41, 0
      %p120 = por %p118, %p119
      %s121 = ssub.s32 %s35, %s42
      %p122 = scmp.eq.s32.totalorder %s121, 0
      %s124 = sadd.s32 %s123, 1
      %s125 = scalar_select %p122, %s123, %s124
      %p128 = pneg %p122
      %p129 = scmp.eq.s32.totalorder %s35, 1
      %p130 = por %p128, %p129
      %p131 = scmp.ne.s32.totalorder %s123, %s126
      %p132 = scmp.eq.s32.totalorder %s35, 0
      %p133 = por %p131, %p132
      %p134 = scmp.ne.s32.totalorder %s123, %s126
      %p135 = scmp.eq.s32.totalorder %s40, 1
      %p136 = por %p134, %p135
      %p137 = scmp.ne.s32.totalorder %s126, %s127
      %p138 = scmp.eq.s32.totalorder %s40, 0
      %p139 = por %p137, %p138
      %p140 = scmp.ne.s32.totalorder %s126, %s127
      %p141 = scmp.eq.s32.totalorder %s41, 1
      %p142 = por %p140, %p141
      %p144 = scmp.ne.s32.totalorder %s127, %s143
      %p145 = scmp.eq.s32.totalorder %s41, 0
      %p146 = por %p144, %p145
      %s147 = ssub.s32 %s35, %s42
      %p148 = scmp.eq.s32.totalorder %s147, 0
      %s150 = sadd.s32 %s149, 1
      %s151 = scalar_select %p148, %s149, %s150
      %p154 = pneg %p148
      %p155 = scmp.eq.s32.totalorder %s35, 1
      %p156 = por %p154, %p155
      %p157 = scmp.ne.s32.totalorder %s149, %s152
      %p158 = scmp.eq.s32.totalorder %s35, 0
      %p159 = por %p157, %p158
      %p160 = scmp.ne.s32.totalorder %s149, %s152
      %p161 = scmp.eq.s32.totalorder %s40, 1
      %p162 = por %p160, %p161
      %p163 = scmp.ne.s32.totalorder %s152, %s153
      %p164 = scmp.eq.s32.totalorder %s40, 0
      %p165 = por %p163, %p164
      %p166 = scmp.ne.s32.totalorder %s152, %s153
      %p167 = scmp.eq.s32.totalorder %s41, 1
      %p168 = por %p166, %p167
      %p170 = scmp.ne.s32.totalorder %s153, %s169
      %p171 = scmp.eq.s32.totalorder %s41, 0
      %p172 = por %p170, %p171
      %s174 = sadd.s32 %s173, 1
      %p177 = scmp.eq.s32.totalorder %s35, 1
      %p178 = scmp.ne.s32.totalorder %s173, %s175
      %p179 = scmp.eq.s32.totalorder %s35, 0
      %p180 = por %p178, %p179
      %p181 = scmp.ne.s32.totalorder %s173, %s175
      %p182 = scmp.eq.s32.totalorder %s40, 1
      %p183 = por %p181, %p182
      %p184 = scmp.ne.s32.totalorder %s175, %s176
      %p185 = scmp.eq.s32.totalorder %s40, 0
      %p186 = por %p184, %p185
      %p187 = scmp.ne.s32.totalorder %s175, %s176
      %p188 = scmp.eq.s32.totalorder %s41, 1
      %p189 = por %p187, %p188
      %p191 = scmp.ne.s32.totalorder %s176, %s190
      %p192 = scmp.eq.s32.totalorder %s41, 0
      %p193 = por %p191, %p192
      %s195 = sadd.s32 %s194, 1
      %p198 = scmp.eq.s32.totalorder %s35, 1
      %p199 = scmp.ne.s32.totalorder %s194, %s196
      %p200 = scmp.eq.s32.totalorder %s35, 0
      %p201 = por %p199, %p200
      %p202 = scmp.ne.s32.totalorder %s194, %s196
      %p203 = scmp.eq.s32.totalorder %s40, 1
      %p204 = por %p202, %p203
      %p205 = scmp.ne.s32.totalorder %s196, %s197
      %p206 = scmp.eq.s32.totalorder %s40, 0
      %p207 = por %p205, %p206
      %p208 = scmp.ne.s32.totalorder %s196, %s197
      %p209 = scmp.eq.s32.totalorder %s41, 1
      %p210 = por %p208, %p209
      %p212 = scmp.ne.s32.totalorder %s197, %s211
      %p213 = scmp.eq.s32.totalorder %s41, 0
      %p214 = por %p212, %p213
      %s216 = sadd.s32 %s215, 1
      %p219 = scmp.eq.s32.totalorder %s35, 1
      %p220 = scmp.ne.s32.totalorder %s215, %s217
      %p221 = scmp.eq.s32.totalorder %s35, 0
      %p222 = por %p220, %p221
      %p223 = scmp.ne.s32.totalorder %s215, %s217
      %p224 = scmp.eq.s32.totalorder %s40, 1
      %p225 = por %p223, %p224
      %p226 = scmp.ne.s32.totalorder %s217, %s218
      %p227 = scmp.eq.s32.totalorder %s40, 0
      %p228 = por %p226, %p227
      %p229 = scmp.ne.s32.totalorder %s217, %s218
      %p230 = scmp.eq.s32.totalorder %s41, 1
      %p231 = por %p229, %p230
      %p233 = scmp.ne.s32.totalorder %s218, %s232
      %p234 = scmp.eq.s32.totalorder %s41, 0
      %p235 = por %p233, %p234
      %s237 = sadd.s32 %s236, 1
      %p240 = scmp.eq.s32.totalorder %s35, 1
      %p241 = scmp.ne.s32.totalorder %s236, %s238
      %p242 = scmp.eq.s32.totalorder %s35, 0
      %p243 = por %p241, %p242
      %p244 = scmp.ne.s32.totalorder %s236, %s238
      %p245 = scmp.eq.s32.totalorder %s40, 1
      %p246 = por %p244, %p245
      %p247 = scmp.ne.s32.totalorder %s238, %s239
      %p248 = scmp.eq.s32.totalorder %s40, 0
      %p249 = por %p247, %p248
      %p250 = scmp.ne.s32.totalorder %s238, %s239
      %p251 = scmp.eq.s32.totalorder %s41, 1
      %p252 = por %p250, %p251
      %p254 = scmp.ne.s32.totalorder %s239, %s253
      %p255 = scmp.eq.s32.totalorder %s41, 0
      %p256 = por %p254, %p255
      %s258 = sadd.s32 %s257, 1
      %p261 = scmp.eq.s32.totalorder %s35, 1
      %p262 = scmp.ne.s32.totalorder %s257, %s259
      %p263 = scmp.eq.s32.totalorder %s35, 0
      %p264 = por %p262, %p263
      %p265 = scmp.ne.s32.totalorder %s257, %s259
      %p266 = scmp.eq.s32.totalorder %s40, 1
      %p267 = por %p265, %p266
      %p268 = scmp.ne.s32.totalorder %s259, %s260
      %p269 = scmp.eq.s32.totalorder %s40, 0
      %p270 = por %p268, %p269
      %p271 = scmp.ne.s32.totalorder %s259, %s260
      %p272 = scmp.eq.s32.totalorder %s41, 1
      %p273 = por %p271, %p272
      %p275 = scmp.ne.s32.totalorder %s260, %s274
      %p276 = scmp.eq.s32.totalorder %s41, 0
      %p277 = por %p275, %p276
      %s279 = sadd.s32 %s278, 1
      %p282 = scmp.eq.s32.totalorder %s35, 1
      %p283 = scmp.ne.s32.totalorder %s278, %s280
      %p284 = scmp.eq.s32.totalorder %s35, 0
      %p285 = por %p283, %p284
      %p286 = scmp.ne.s32.totalorder %s278, %s280
      %p287 = scmp.eq.s32.totalorder %s40, 1
      %p288 = por %p286, %p287
      %p289 = scmp.ne.s32.totalorder %s280, %s281
      %p290 = scmp.eq.s32.totalorder %s40, 0
      %p291 = por %p289, %p290
      %p292 = scmp.ne.s32.totalorder %s280, %s281
      %p293 = scmp.eq.s32.totalorder %s41, 1
      %p294 = por %p292, %p293
      %p296 = scmp.ne.s32.totalorder %s281, %s295
      %p297 = scmp.eq.s32.totalorder %s41, 0
      %p298 = por %p296, %p297
      %s300 = sadd.s32 %s299, 1
      %p303 = scmp.eq.s32.totalorder %s35, 1
      %p304 = scmp.ne.s32.totalorder %s299, %s301
      %p305 = scmp.eq.s32.totalorder %s35, 0
      %p306 = por %p304, %p305
      %p307 = scmp.ne.s32.totalorder %s299, %s301
      %p308 = scmp.eq.s32.totalorder %s40, 1
      %p309 = por %p307, %p308
      %p310 = scmp.ne.s32.totalorder %s301, %s302
      %p311 = scmp.eq.s32.totalorder %s40, 0
      %p312 = por %p310, %p311
      %p313 = scmp.ne.s32.totalorder %s301, %s302
      %p314 = scmp.eq.s32.totalorder %s41, 1
      %p315 = por %p313, %p314
      %p317 = scmp.ne.s32.totalorder %s302, %s316
      %p318 = scmp.eq.s32.totalorder %s41, 0
      %p319 = por %p317, %p318
      %s321 = sadd.s32 %s320, 1
      %p324 = scmp.eq.s32.totalorder %s35, 1
      %p325 = scmp.ne.s32.totalorder %s320, %s322
      %p326 = scmp.eq.s32.totalorder %s35, 0
      %p327 = por %p325, %p326
      %p328 = scmp.ne.s32.totalorder %s320, %s322
      %p329 = scmp.eq.s32.totalorder %s40, 1
      %p330 = por %p328, %p329
      %p331 = scmp.ne.s32.totalorder %s322, %s323
      %p332 = scmp.eq.s32.totalorder %s40, 0
      %p333 = por %p331, %p332
      %p334 = scmp.ne.s32.totalorder %s322, %s323
      %p335 = scmp.eq.s32.totalorder %s41, 1
      %p336 = por %p334, %p335
      %p338 = scmp.ne.s32.totalorder %s323, %s337
      %p339 = scmp.eq.s32.totalorder %s41, 0
      %p340 = por %p338, %p339
      %s342 = sadd.s32 %s341, 1
      %p345 = scmp.eq.s32.totalorder %s35, 1
      %p346 = scmp.ne.s32.totalorder %s341, %s343
      %p347 = scmp.eq.s32.totalorder %s35, 0
      %p348 = por %p346, %p347
      %p349 = scmp.ne.s32.totalorder %s341, %s343
      %p350 = scmp.eq.s32.totalorder %s40, 1
      %p351 = por %p349, %p350
      %p352 = scmp.ne.s32.totalorder %s343, %s344
      %p353 = scmp.eq.s32.totalorder %s40, 0
      %p354 = por %p352, %p353
      %p355 = scmp.ne.s32.totalorder %s343, %s344
      %p356 = scmp.eq.s32.totalorder %s41, 1
      %p357 = por %p355, %p356
      %p359 = scmp.ne.s32.totalorder %s344, %s358
      %p360 = scmp.eq.s32.totalorder %s41, 0
      %p361 = por %p359, %p360
      %s363 = sadd.s32 %s362, 1
      %p366 = scmp.eq.s32.totalorder %s35, 1
      %p367 = scmp.ne.s32.totalorder %s362, %s364
      %p368 = scmp.eq.s32.totalorder %s35, 0
      %p369 = por %p367, %p368
      %p370 = scmp.ne.s32.totalorder %s362, %s364
      %p371 = scmp.eq.s32.totalorder %s40, 1
      %p372 = por %p370, %p371
      %p373 = scmp.ne.s32.totalorder %s364, %s365
      %p374 = scmp.eq.s32.totalorder %s40, 0
      %p375 = por %p373, %p374
      %p376 = scmp.ne.s32.totalorder %s364, %s365
      %p377 = scmp.eq.s32.totalorder %s41, 1
      %p378 = por %p376, %p377
      %p380 = scmp.ne.s32.totalorder %s365, %s379
      %p381 = scmp.eq.s32.totalorder %s41, 0
      %p382 = por %p380, %p381
      %s384 = sadd.s32 %s383, 1
      %p387 = scmp.eq.s32.totalorder %s35, 1
      %p388 = scmp.ne.s32.totalorder %s383, %s385
      %p389 = scmp.eq.s32.totalorder %s35, 0
      %p390 = por %p388, %p389
      %p391 = scmp.ne.s32.totalorder %s383, %s385
      %p392 = scmp.eq.s32.totalorder %s40, 1
      %p393 = por %p391, %p392
      %p394 = scmp.ne.s32.totalorder %s385, %s386
      %p395 = scmp.eq.s32.totalorder %s40, 0
      %p396 = por %p394, %p395
      %p397 = scmp.ne.s32.totalorder %s385, %s386
      %p398 = scmp.eq.s32.totalorder %s41, 1
      %p399 = por %p397, %p398
      %p401 = scmp.ne.s32.totalorder %s386, %s400
      %p402 = scmp.eq.s32.totalorder %s41, 0
      %p403 = por %p401, %p402
      %s405 = sadd.s32 %s404, 1
      %p408 = scmp.eq.s32.totalorder %s35, 1
      %p409 = scmp.ne.s32.totalorder %s404, %s406
      %p410 = scmp.eq.s32.totalorder %s35, 0
      %p411 = por %p409, %p410
      %p412 = scmp.ne.s32.totalorder %s404, %s406
      %p413 = scmp.eq.s32.totalorder %s40, 1
      %p414 = por %p412, %p413
      %p415 = scmp.ne.s32.totalorder %s406, %s407
      %p416 = scmp.eq.s32.totalorder %s40, 0
      %p417 = por %p415, %p416
      %p418 = scmp.ne.s32.totalorder %s406, %s407
      %p419 = scmp.eq.s32.totalorder %s41, 1
      %p420 = por %p418, %p419
      %p422 = scmp.ne.s32.totalorder %s407, %s421
      %p423 = scmp.eq.s32.totalorder %s41, 0
      %p424 = por %p422, %p423
      %s426 = sadd.s32 %s425, 1
      %p429 = scmp.eq.s32.totalorder %s35, 1
      %p430 = scmp.ne.s32.totalorder %s425, %s427
      %p431 = scmp.eq.s32.totalorder %s35, 0
      %p432 = por %p430, %p431
      %p433 = scmp.ne.s32.totalorder %s425, %s427
      %p434 = scmp.eq.s32.totalorder %s40, 1
      %p435 = por %p433, %p434
      %p436 = scmp.ne.s32.totalorder %s427, %s428
      %p437 = scmp.eq.s32.totalorder %s40, 0
      %p438 = por %p436, %p437
      %p439 = scmp.ne.s32.totalorder %s427, %s428
      %p440 = scmp.eq.s32.totalorder %s41, 1
      %p441 = por %p439, %p440
      %p443 = scmp.ne.s32.totalorder %s428, %s442
      %p444 = scmp.eq.s32.totalorder %s41, 0
      %p445 = por %p443, %p444
      %s447 = sadd.s32 %s446, 1
      %p450 = scmp.eq.s32.totalorder %s35, 1
      %p451 = scmp.ne.s32.totalorder %s446, %s448
      %p452 = scmp.eq.s32.totalorder %s35, 0
      %p453 = por %p451, %p452
      %p454 = scmp.ne.s32.totalorder %s446, %s448
      %p455 = scmp.eq.s32.totalorder %s40, 1
      %p456 = por %p454, %p455
      %p457 = scmp.ne.s32.totalorder %s448, %s449
      %p458 = scmp.eq.s32.totalorder %s40, 0
      %p459 = por %p457, %p458
      %p460 = scmp.ne.s32.totalorder %s448, %s449
      %p461 = scmp.eq.s32.totalorder %s41, 1
      %p462 = por %p460, %p461
      %p464 = scmp.ne.s32.totalorder %s449, %s463
      %p465 = scmp.eq.s32.totalorder %s41, 0
      %p466 = por %p464, %p465
      %s468 = sadd.s32 %s467, 1
      %p471 = scmp.eq.s32.totalorder %s35, 1
      %p472 = scmp.ne.s32.totalorder %s467, %s469
      %p473 = scmp.eq.s32.totalorder %s35, 0
      %p474 = por %p472, %p473
      %p475 = scmp.ne.s32.totalorder %s467, %s469
      %p476 = scmp.eq.s32.totalorder %s40, 1
      %p477 = por %p475, %p476
      %p478 = scmp.ne.s32.totalorder %s469, %s470
      %p479 = scmp.eq.s32.totalorder %s40, 0
      %p480 = por %p478, %p479
      %p481 = scmp.ne.s32.totalorder %s469, %s470
      %p482 = scmp.eq.s32.totalorder %s41, 1
      %p483 = por %p481, %p482
      %p485 = scmp.ne.s32.totalorder %s470, %s484
      %p486 = scmp.eq.s32.totalorder %s41, 0
      %p487 = por %p485, %p486
      %s488 = ssub.s32 %s35, %s42
      %p489 = scmp.eq.s32.totalorder %s488, 0
      %s491 = sadd.s32 %s490, 1
      %s492 = scalar_select %p489, %s490, %s491
      %p495 = pneg %p489
      %p496 = scmp.eq.s32.totalorder %s35, 1
      %p497 = por %p495, %p496
      %p498 = scmp.ne.s32.totalorder %s490, %s493
      %p499 = scmp.eq.s32.totalorder %s35, 0
      %p500 = por %p498, %p499
      %p501 = scmp.ne.s32.totalorder %s490, %s493
      %p502 = scmp.eq.s32.totalorder %s40, 1
      %p503 = por %p501, %p502
      %p504 = scmp.ne.s32.totalorder %s493, %s494
      %p505 = scmp.eq.s32.totalorder %s40, 0
      %p506 = por %p504, %p505
      %p507 = scmp.ne.s32.totalorder %s493, %s494
      %p508 = scmp.eq.s32.totalorder %s41, 1
      %p509 = por %p507, %p508
      %p511 = scmp.ne.s32.totalorder %s494, %s510
      %p512 = scmp.eq.s32.totalorder %s41, 0
      %p513 = por %p511, %p512
      %p514 = scmp.le.s32.totalorder 1, %s35
      %p515 = scmp.lt.s32.totalorder %s35, 3
      %p516 = pnand %p514, %p515
      %p517 = pneg %p516
      // Predicated region
      $region9: #{tpu_custom_call.1} parent=5 // pred_check
        _
      $region10: #{tpu_custom_call.1} parent=5 // pred_check_branch
        %519 = sbr.rel (%p516) target = $region12
      $region11: #{tpu_custom_call.1} parent=5 // pred_region
        %s520 = ssub.s32 %s35, 1
        // Predicated region
        $region13: #{tpu_custom_call.1} parent=11 // pred_check
          %p521 = pneg %p186
        $region14: #{tpu_custom_call.1} parent=11 // pred_check_branch
          %523 = sbr.rel (%p521) target = $region16
        $region15: #{tpu_custom_call.1} parent=11 // pred_region
          %525 = vsyncadd [#allocation6], 0
          %s527 = sshll.u32 %s5, 4
          %s528 = int_to_ptr.hbm [resolvable:$true] %s527
          %s529 = sshll.u32 [#allocation5], 4
          %s530 = int_to_ptr.vmem [resolvable:$true] %s529
          %532 = dma.hbm_to_vmem [thread:$0]  %s528, 16, %s530, [#allocation6]
        $region16: #{tpu_custom_call.1} parent=11 // pred_fallthru
          _
        // Predicated region
        $region17: #{tpu_custom_call.1} parent=11 // pred_check
          %p533 = pneg %p207
        $region18: #{tpu_custom_call.1} parent=11 // pred_check_branch
          %535 = sbr.rel (%p533) target = $region20
        $region19: #{tpu_custom_call.1} parent=11 // pred_region
          _
        $region20: #{tpu_custom_call.1} parent=11 // pred_fallthru
          _
        // Predicated region
        $region21: #{tpu_custom_call.1} parent=11 // pred_check
          %p536 = pneg %p228
        $region22: #{tpu_custom_call.1} parent=11 // pred_check_branch
          %538 = sbr.rel (%p536) target = $region24
        $region23: #{tpu_custom_call.1} parent=11 // pred_region
          _
        $region24: #{tpu_custom_call.1} parent=11 // pred_fallthru
          _
        // Predicated region
        $region25: #{tpu_custom_call.1} parent=11 // pred_check
          %p539 = pneg %p249
        $region26: #{tpu_custom_call.1} parent=11 // pred_check_branch
          %541 = sbr.rel (%p539) target = $region28
        $region27: #{tpu_custom_call.1} parent=11 // pred_region
          _
        $region28: #{tpu_custom_call.1} parent=11 // pred_fallthru
          _
        // Predicated region
        $region29: #{tpu_custom_call.1} parent=11 // pred_check
          %p542 = pneg %p270
        $region30: #{tpu_custom_call.1} parent=11 // pred_check_branch
          %544 = sbr.rel (%p542) target = $region32
        $region31: #{tpu_custom_call.1} parent=11 // pred_region
          _
        $region32: #{tpu_custom_call.1} parent=11 // pred_fallthru
          _
        // Predicated region
        $region33: #{tpu_custom_call.1} parent=11 // pred_check
          %p545 = pneg %p291
        $region34: #{tpu_custom_call.1} parent=11 // pred_check_branch
          %547 = sbr.rel (%p545) target = $region36
        $region35: #{tpu_custom_call.1} parent=11 // pred_region
          %549 = vsyncadd [#allocation6], 0
          %s550 = sshll.u32 %s10, 4
          %s551 = int_to_ptr.hbm [resolvable:$true] %s550
          %s552 = sshll.u32 [#allocation7], 4
          %s553 = int_to_ptr.vmem [resolvable:$true] %s552
          %558 = dma.hbm_to_vmem [thread:$0]  %s551, 2048, %s553, [#allocation6], 128, 128, 8
        $region36: #{tpu_custom_call.1} parent=11 // pred_fallthru
          _
        // Predicated region
        $region37: #{tpu_custom_call.1} parent=11 // pred_check
          %p559 = pneg %p312
        $region38: #{tpu_custom_call.1} parent=11 // pred_check_branch
          %561 = sbr.rel (%p559) target = $region40
        $region39: #{tpu_custom_call.1} parent=11 // pred_region
          _
        $region40: #{tpu_custom_call.1} parent=11 // pred_fallthru
          _
        // Predicated region
        $region41: #{tpu_custom_call.1} parent=11 // pred_check
          %p562 = pneg %p333
        $region42: #{tpu_custom_call.1} parent=11 // pred_check_branch
          %564 = sbr.rel (%p562) target = $region44
        $region43: #{tpu_custom_call.1} parent=11 // pred_region
          %566 = vsyncadd [#allocation9], 0
          %s567 = sshll.u32 %s12, 4
          %s568 = int_to_ptr.hbm [resolvable:$true] %s567
          %s569 = sshll.u32 [#allocation8], 4
          %s570 = int_to_ptr.vmem [resolvable:$true] %s569
          %575 = dma.hbm_to_vmem [thread:$0]  %s568, 2048, %s570, [#allocation9], 128, 128, 8
        $region44: #{tpu_custom_call.1} parent=11 // pred_fallthru
          _
        // Predicated region
        $region45: #{tpu_custom_call.1} parent=11 // pred_check
          %p576 = pneg %p354
        $region46: #{tpu_custom_call.1} parent=11 // pred_check_branch
          %578 = sbr.rel (%p576) target = $region48
        $region47: #{tpu_custom_call.1} parent=11 // pred_region
          _
        $region48: #{tpu_custom_call.1} parent=11 // pred_fallthru
          _
        // Predicated region
        $region49: #{tpu_custom_call.1} parent=11 // pred_check
          %p579 = pneg %p375
        $region50: #{tpu_custom_call.1} parent=11 // pred_check_branch
          %581 = sbr.rel (%p579) target = $region52
        $region51: #{tpu_custom_call.1} parent=11 // pred_region
          %583 = vsyncadd [#allocation9], 0
          %s584 = sshll.u32 %s14, 4
          %s585 = int_to_ptr.hbm [resolvable:$true] %s584
          %s586 = sshll.u32 [#allocation10], 4
          %s587 = int_to_ptr.vmem [resolvable:$true] %s586
          %592 = dma.hbm_to_vmem [thread:$0]  %s585, 2048, %s587, [#allocation9], 128, 128, 8
        $region52: #{tpu_custom_call.1} parent=11 // pred_fallthru
          _
        // Predicated region
        $region53: #{tpu_custom_call.1} parent=11 // pred_check
          %p593 = pneg %p396
        $region54: #{tpu_custom_call.1} parent=11 // pred_check_branch
          %595 = sbr.rel (%p593) target = $region56
        $region55: #{tpu_custom_call.1} parent=11 // pred_region
          _
        $region56: #{tpu_custom_call.1} parent=11 // pred_fallthru
          _
        // Predicated region
        $region57: #{tpu_custom_call.1} parent=11 // pred_check
          %p596 = pneg %p417
        $region58: #{tpu_custom_call.1} parent=11 // pred_check_branch
          %598 = sbr.rel (%p596) target = $region60
        $region59: #{tpu_custom_call.1} parent=11 // pred_region
          %600 = vsyncadd [#allocation12], 0
          %s601 = sshll.u32 %s16, 4
          %s602 = int_to_ptr.hbm [resolvable:$true] %s601
          %s603 = sshll.u32 [#allocation11], 4
          %s604 = int_to_ptr.vmem [resolvable:$true] %s603
          %609 = dma.hbm_to_vmem [thread:$0]  %s602, 2048, %s604, [#allocation12], 128, 128, 8
        $region60: #{tpu_custom_call.1} parent=11 // pred_fallthru
          _
        // Predicated region
        $region61: #{tpu_custom_call.1} parent=11 // pred_check
          %p610 = pneg %p438
        $region62: #{tpu_custom_call.1} parent=11 // pred_check_branch
          %612 = sbr.rel (%p610) target = $region64
        $region63: #{tpu_custom_call.1} parent=11 // pred_region
          _
        $region64: #{tpu_custom_call.1} parent=11 // pred_fallthru
          _
        // Predicated region
        $region65: #{tpu_custom_call.1} parent=11 // pred_check
          %p613 = pneg %p459
        $region66: #{tpu_custom_call.1} parent=11 // pred_check_branch
          %615 = sbr.rel (%p613) target = $region68
        $region67: #{tpu_custom_call.1} parent=11 // pred_region
          %617 = vsyncadd [#allocation12], 0
          %s618 = sshll.u32 %s18, 4
          %s619 = int_to_ptr.hbm [resolvable:$true] %s618
          %s620 = sshll.u32 [#allocation13], 4
          %s621 = int_to_ptr.vmem [resolvable:$true] %s620
          %626 = dma.hbm_to_vmem [thread:$0]  %s619, 2048, %s621, [#allocation12], 128, 128, 8
        $region68: #{tpu_custom_call.1} parent=11 // pred_fallthru
          _
        // Predicated region
        $region69: #{tpu_custom_call.1} parent=11 // pred_check
          %p627 = pneg %p480
        $region70: #{tpu_custom_call.1} parent=11 // pred_check_branch
          %629 = sbr.rel (%p627) target = $region72
        $region71: #{tpu_custom_call.1} parent=11 // pred_region
          _
        $region72: #{tpu_custom_call.1} parent=11 // pred_fallthru
          _
      $region12: #{tpu_custom_call.1} parent=5 // pred_fallthru
        _
      %p630 = scmp.lt.s32.totalorder %s35, 2
      // Predicated region
      $region73: #{tpu_custom_call.1} parent=5 // pred_check
        %p631 = pneg %p630
      $region74: #{tpu_custom_call.1} parent=5 // pred_check_branch
        %633 = sbr.rel (%p631) target = $region76
      $region75: #{tpu_custom_call.1} parent=5 // pred_region
        // Predicated region
        $region77: #{tpu_custom_call.1} parent=75 // pred_check
          %p634 = pneg %p55
        $region78: #{tpu_custom_call.1} parent=75 // pred_check_branch
          %636 = sbr.rel (%p634) target = $region80
        $region79: #{tpu_custom_call.1} parent=75 // pred_region
          %p637 = scmp.lt.s32.totalorder %s35, 1
          %s638 = scalar_select %p637, %s35, 1
          %s639 = smul.addr %s638, 16
          %s640 = smul.addr %s639, 8
          %s641 = scalar_lea.vmem %s0, %s640
        $region80: #{tpu_custom_call.1} parent=75 // pred_fallthru
          _
        // Predicated region
        $region81: #{tpu_custom_call.1} parent=75 // pred_check
          %p642 = pneg %p81
        $region82: #{tpu_custom_call.1} parent=75 // pred_check_branch
          %644 = sbr.rel (%p642) target = $region84
        $region83: #{tpu_custom_call.1} parent=75 // pred_region
          %p645 = scmp.lt.s32.totalorder %s35, 1
          %s646 = scalar_select %p645, %s35, 1
          %s647 = smul.addr %s646, 16
          %s648 = smul.addr %s647, 8
          %s649 = scalar_lea.vmem %s1, %s648
        $region84: #{tpu_custom_call.1} parent=75 // pred_fallthru
          _
        // Predicated region
        $region85: #{tpu_custom_call.1} parent=75 // pred_check
          %p650 = pneg %p107
        $region86: #{tpu_custom_call.1} parent=75 // pred_check_branch
          %652 = sbr.rel (%p650) target = $region88
        $region87: #{tpu_custom_call.1} parent=75 // pred_region
          %p653 = scmp.lt.s32.totalorder %s35, 1
          %s654 = scalar_select %p653, %s35, 1
          %s655 = scalar_lea.vmem %s2, %s654
        $region88: #{tpu_custom_call.1} parent=75 // pred_fallthru
          _
        // Predicated region
        $region89: #{tpu_custom_call.1} parent=75 // pred_check
          %p656 = pneg %p133
        $region90: #{tpu_custom_call.1} parent=75 // pred_check_branch
          %658 = sbr.rel (%p656) target = $region92
        $region91: #{tpu_custom_call.1} parent=75 // pred_region
          %p659 = scmp.lt.s32.totalorder %s35, 1
          %s660 = scalar_select %p659, %s35, 1
          %s661 = smul.addr %s660, 16
          %s662 = smul.addr %s661, 8
          %s663 = scalar_lea.vmem %s3, %s662
        $region92: #{tpu_custom_call.1} parent=75 // pred_fallthru
          _
        // Predicated region
        $region93: #{tpu_custom_call.1} parent=75 // pred_check
          %p664 = pneg %p159
        $region94: #{tpu_custom_call.1} parent=75 // pred_check_branch
          %666 = sbr.rel (%p664) target = $region96
        $region95: #{tpu_custom_call.1} parent=75 // pred_region
          %s667 = sand.u32 %s149, 1
          %s668 = scalar_lea.sflag [#allocation3], %s667
          %s669 = sand.u32 %s149, 1
          %s670 = scalar_lea.vmem [#allocation2], %s669
          %672 = vsyncadd %s668, 0
          %s673 = scalar_lea.hbm %s4, %s35
          %s675 = sshll.u32 %s673, 4
          %s676 = int_to_ptr.hbm [resolvable:$true] %s675
          %s677 = sshll.u32 %s670, 4
          %s678 = int_to_ptr.vmem [resolvable:$true] %s677
          %680 = dma.hbm_to_vmem [thread:$0]  %s676, 16, %s678, %s668
        $region96: #{tpu_custom_call.1} parent=75 // pred_fallthru
          _
      $region76: #{tpu_custom_call.1} parent=5 // pred_fallthru
        _
      %p681 = scmp.le.s32.totalorder 1, %s35
      %p682 = scmp.lt.s32.totalorder %s35, 3
      %p683 = pnand %p681, %p682
      %p684 = pneg %p683
      // Predicated region
      $region97: #{tpu_custom_call.1} parent=5 // pred_check
        _
      $region98: #{tpu_custom_call.1} parent=5 // pred_check_branch
        %686 = sbr.rel (%p683) target = $region100
      $region99: #{tpu_custom_call.1} parent=5 // pred_region
        %s687 = ssub.s32 %s35, 1
        %s688 = sand.u32 %s152, 1
        %s689 = scalar_lea.sflag [#allocation3], %s688
        %s690 = sand.u32 %s152, 1
        %s691 = scalar_lea.vmem [#allocation2], %s690
        // Predicated region
        $region101: #{tpu_custom_call.1} parent=99 // pred_check
          %p692 = pneg %p165
        $region102: #{tpu_custom_call.1} parent=99 // pred_check_branch
          %694 = sbr.rel (%p692) target = $region104
        $region103: #{tpu_custom_call.1} parent=99 // pred_region
          %696 = dma.done %s689, 16
        $region104: #{tpu_custom_call.1} parent=99 // pred_fallthru
          _
        // Predicated region
        $region105: #{tpu_custom_call.1} parent=99 // pred_check
          %p697 = pneg %p186
        $region106: #{tpu_custom_call.1} parent=99 // pred_check_branch
          %699 = sbr.rel (%p697) target = $region108
        $region107: #{tpu_custom_call.1} parent=99 // pred_region
          %701 = dma.done [#allocation6], 16
        $region108: #{tpu_custom_call.1} parent=99 // pred_fallthru
          _
        // Predicated region
        $region109: #{tpu_custom_call.1} parent=99 // pred_check
          %p702 = pneg %p291
        $region110: #{tpu_custom_call.1} parent=99 // pred_check_branch
          %704 = sbr.rel (%p702) target = $region112
        $region111: #{tpu_custom_call.1} parent=99 // pred_region
          %706 = dma.done [#allocation6], 2048
        $region112: #{tpu_custom_call.1} parent=99 // pred_fallthru
          _
        // Predicated region
        $region113: #{tpu_custom_call.1} parent=99 // pred_check
          %p707 = pneg %p333
        $region114: #{tpu_custom_call.1} parent=99 // pred_check_branch
          %709 = sbr.rel (%p707) target = $region116
        $region115: #{tpu_custom_call.1} parent=99 // pred_region
          %711 = dma.done [#allocation9], 2048
        $region116: #{tpu_custom_call.1} parent=99 // pred_fallthru
          _
        // Predicated region
        $region117: #{tpu_custom_call.1} parent=99 // pred_check
          %p712 = pneg %p375
        $region118: #{tpu_custom_call.1} parent=99 // pred_check_branch
          %714 = sbr.rel (%p712) target = $region120
        $region119: #{tpu_custom_call.1} parent=99 // pred_region
          %716 = dma.done [#allocation9], 2048
        $region120: #{tpu_custom_call.1} parent=99 // pred_fallthru
          _
        // Predicated region
        $region121: #{tpu_custom_call.1} parent=99 // pred_check
          %p717 = pneg %p417
        $region122: #{tpu_custom_call.1} parent=99 // pred_check_branch
          %719 = sbr.rel (%p717) target = $region124
        $region123: #{tpu_custom_call.1} parent=99 // pred_region
          %721 = dma.done [#allocation12], 2048
        $region124: #{tpu_custom_call.1} parent=99 // pred_fallthru
          _
        // Predicated region
        $region125: #{tpu_custom_call.1} parent=99 // pred_check
          %p722 = pneg %p459
        $region126: #{tpu_custom_call.1} parent=99 // pred_check_branch
          %724 = sbr.rel (%p722) target = $region128
        $region127: #{tpu_custom_call.1} parent=99 // pred_region
          %726 = dma.done [#allocation12], 2048
        $region128: #{tpu_custom_call.1} parent=99 // pred_fallthru
          _
        %p727 = scmp.lt.s32.totalorder %s40, 1
        %s728 = scalar_select %p727, %s40, 1
        %s729 = smul.addr %s728, 16
        %s730 = smul.addr %s729, 8
        %s731 = scalar_lea.vmem %s0, %s730
        %p732 = pneg %p61
        %p733 = pneg %p58
        %p734 = scmp.lt.s32.totalorder %s40, 1
        %s735 = scalar_select %p734, %s40, 1
        %s736 = smul.addr %s735, 16
        %s737 = smul.addr %s736, 8
        %s738 = scalar_lea.vmem %s1, %s737
        %p739 = pneg %p87
        %p740 = pneg %p84
        %p741 = scmp.lt.s32.totalorder %s40, 1
        %s742 = scalar_select %p741, %s40, 1
        %s743 = scalar_lea.vmem %s2, %s742
        %p744 = pneg %p113
        %p745 = pneg %p110
        %p746 = scmp.lt.s32.totalorder %s40, 1
        %s747 = scalar_select %p746, %s40, 1
        %s748 = smul.addr %s747, 16
        %s749 = smul.addr %s748, 8
        %s750 = scalar_lea.vmem %s3, %s749
        %p751 = pneg %p139
        %p752 = pneg %p136
        %s753 = sand.u32 %s152, 1
        %s754 = scalar_lea.sflag [#allocation3], %s753
        %s755 = sand.u32 %s152, 1
        %s756 = scalar_lea.vmem [#allocation2], %s755
        %p757 = pneg %p165
        %p758 = pneg %p162
        %p759 = pneg %p186
        %p760 = pneg %p183
        %p761 = pneg %p207
        %p762 = pneg %p204
        %p763 = pneg %p228
        %p764 = pneg %p225
        %p765 = pneg %p249
        %p766 = pneg %p246
        %p767 = pneg %p270
        %p768 = pneg %p267
        %p769 = pneg %p291
        %p770 = pneg %p288
        %p771 = pneg %p312
        %p772 = pneg %p309
        %p773 = pneg %p333
        %p774 = pneg %p330
        %p775 = pneg %p354
        %p776 = pneg %p351
        %p777 = pneg %p375
        %p778 = pneg %p372
        %p779 = pneg %p396
        %p780 = pneg %p393
        %p781 = pneg %p417
        %p782 = pneg %p414
        %p783 = pneg %p438
        %p784 = pneg %p435
        %p785 = pneg %p459
        %p786 = pneg %p456
        %p787 = pneg %p480
        %p788 = pneg %p477
        %p789 = pneg %p506
        %p790 = pneg %p503
        %s791 = sand.u32 %s493, 1
        %s792 = scalar_lea.sflag [#allocation4], %s791
        %s793 = sand.u32 %s493, 1
        %s794 = smul.addr %s793, 8
        %s795 = scalar_lea.vmem [#allocation14], %s794
        %p796 = scmp.lt.s32.totalorder %s40, 1
        %s797 = scalar_select %p796, %s40, 1
        %s798 = smul.addr %s797, 16
        %s799 = smul.addr %s798, 8
        %s800 = scalar_lea.vmem %s0, %s799
        %p801 = scmp.lt.s32.totalorder %s40, 1
        %s802 = scalar_select %p801, %s40, 1
        %s803 = smul.addr %s802, 16
        %s804 = smul.addr %s803, 8
        %s805 = scalar_lea.vmem %s1, %s804
        %p806 = scmp.lt.s32.totalorder %s40, 1
        %s807 = scalar_select %p806, %s40, 1
        %s808 = scalar_lea.vmem %s2, %s807
        %p809 = scmp.lt.s32.totalorder %s40, 1
        %s810 = scalar_select %p809, %s40, 1
        %s811 = smul.addr %s810, 16
        %s812 = smul.addr %s811, 8
        %s813 = scalar_lea.vmem %s3, %s812
        %v814 = vld [vmem:[%s800] sm:$0xff]
        %v815 = vld [vmem:[%s800 + $0x8] sm:$0xff]
        %v816 = vld [vmem:[%s800 + $0x10] sm:$0xff]
        %v817 = vld [vmem:[%s800 + $0x18] sm:$0xff]
        %v818 = vld [vmem:[%s800 + $0x20] sm:$0xff]
        %v819 = vld [vmem:[%s800 + $0x28] sm:$0xff]
        %v820 = vld [vmem:[%s800 + $0x30] sm:$0xff]
        %v821 = vld [vmem:[%s800 + $0x38] sm:$0xff]
        %v822 = vld [vmem:[%s800 + $0x40] sm:$0xff]
        %v823 = vld [vmem:[%s800 + $0x48] sm:$0xff]
        %v824 = vld [vmem:[%s800 + $0x50] sm:$0xff]
        %v825 = vld [vmem:[%s800 + $0x58] sm:$0xff]
        %v826 = vld [vmem:[%s800 + $0x60] sm:$0xff]
        %v827 = vld [vmem:[%s800 + $0x68] sm:$0xff]
        %v828 = vld [vmem:[%s800 + $0x70] sm:$0xff]
        %v829 = vld [vmem:[%s800 + $0x78] sm:$0xff]
        %v830 = vld [vmem:[%s6] sm:$0xff]
        %v831 = vld [vmem:[%s6 + $0x8] sm:$0xff]
        %v832 = vld [vmem:[%s6 + $0x10] sm:$0xff]
        %v833 = vld [vmem:[%s6 + $0x18] sm:$0xff]
        %v834 = vld [vmem:[%s6 + $0x20] sm:$0xff]
        %v835 = vld [vmem:[%s6 + $0x28] sm:$0xff]
        %v836 = vld [vmem:[%s6 + $0x30] sm:$0xff]
        %v837 = vld [vmem:[%s6 + $0x38] sm:$0xff]
        %v838 = vld [vmem:[%s6 + $0x40] sm:$0xff]
        %v839 = vld [vmem:[%s6 + $0x48] sm:$0xff]
        %v840 = vld [vmem:[%s6 + $0x50] sm:$0xff]
        %v841 = vld [vmem:[%s6 + $0x58] sm:$0xff]
        %v842 = vld [vmem:[%s6 + $0x60] sm:$0xff]
        %v843 = vld [vmem:[%s6 + $0x68] sm:$0xff]
        %v844 = vld [vmem:[%s6 + $0x70] sm:$0xff]
        %v845 = vld [vmem:[%s6 + $0x78] sm:$0xff]
        %v846 = vld [vmem:[%s7] sm:$0x1]
        %v848 = vperm.slane %v846, 0
        %850 = vmatpush.msra.mxu0 %v845
        %851 = vmatpush.msra.mxu0 %v844
        %852 = vmatpush.msra.mxu0 %v843
        %853 = vmatpush.msra.mxu0 %v842
        %854 = vmatpush.msra.mxu0 %v841
        %855 = vmatpush.msra.mxu0 %v840
        %856 = vmatpush.msra.mxu0 %v839
        %857 = vmatpush.msra.mxu0 %v838
        %858 = vmatpush.msra.mxu0 %v837
        %859 = vmatpush.msra.mxu0 %v836
        %860 = vmatpush.msra.mxu0 %v835
        %861 = vmatpush.msra.mxu0 %v834
        %862 = vmatpush.msra.mxu0 %v833
        %863 = vmatpush.msra.mxu0 %v832
        %864 = vmatpush.msra.mxu0 %v831
        %865 = vmatpush.msra.mxu0 %v830
        %866 = vmatmul.f32.gmra.mxu0 %v814
        %v867 = vpop.f32.mrf.mxu0
        %v868 = vadd.f32 %v848, %v867
        %869 = vmatmul.f32.gmra.mxu0 %v815
        %v870 = vpop.f32.mrf.mxu0
        %v871 = vadd.f32 %v848, %v870
        %872 = vmatmul.f32.gmra.mxu0 %v816
        %v873 = vpop.f32.mrf.mxu0
        %v874 = vadd.f32 %v848, %v873
        %875 = vmatmul.f32.gmra.mxu0 %v817
        %v876 = vpop.f32.mrf.mxu0
        %v877 = vadd.f32 %v848, %v876
        %878 = vmatmul.f32.gmra.mxu0 %v818
        %v879 = vpop.f32.mrf.mxu0
        %v880 = vadd.f32 %v848, %v879
        %881 = vmatmul.f32.gmra.mxu0 %v819
        %v882 = vpop.f32.mrf.mxu0
        %v883 = vadd.f32 %v848, %v882
        %884 = vmatmul.f32.gmra.mxu0 %v820
        %v885 = vpop.f32.mrf.mxu0
        %v886 = vadd.f32 %v848, %v885
        %887 = vmatmul.f32.gmra.mxu0 %v821
        %v888 = vpop.f32.mrf.mxu0
        %v889 = vadd.f32 %v848, %v888
        %890 = vmatmul.f32.gmra.mxu0 %v822
        %v891 = vpop.f32.mrf.mxu0
        %v892 = vadd.f32 %v848, %v891
        %893 = vmatmul.f32.gmra.mxu0 %v823
        %v894 = vpop.f32.mrf.mxu0
        %v895 = vadd.f32 %v848, %v894
        %896 = vmatmul.f32.gmra.mxu0 %v824
        %v897 = vpop.f32.mrf.mxu0
        %v898 = vadd.f32 %v848, %v897
        %899 = vmatmul.f32.gmra.mxu0 %v825
        %v900 = vpop.f32.mrf.mxu0
        %v901 = vadd.f32 %v848, %v900
        %902 = vmatmul.f32.gmra.mxu0 %v826
        %v903 = vpop.f32.mrf.mxu0
        %v904 = vadd.f32 %v848, %v903
        %905 = vmatmul.f32.gmra.mxu0 %v827
        %v906 = vpop.f32.mrf.mxu0
        %v907 = vadd.f32 %v848, %v906
        %908 = vmatmul.f32.gmra.mxu0 %v828
        %v909 = vpop.f32.mrf.mxu0
        %v910 = vadd.f32 %v848, %v909
        %911 = vmatmul.f32.gmra.mxu0 %v829
        %v912 = vpop.f32.mrf.mxu0
        %v913 = vadd.f32 %v848, %v912
        %914 = vdwg.mxu0
        %v915 = vld [vmem:[%s805] sm:$0xff]
        %v916 = vld [vmem:[%s805 + $0x8] sm:$0xff]
        %v917 = vld [vmem:[%s805 + $0x10] sm:$0xff]
        %v918 = vld [vmem:[%s805 + $0x18] sm:$0xff]
        %v919 = vld [vmem:[%s805 + $0x20] sm:$0xff]
        %v920 = vld [vmem:[%s805 + $0x28] sm:$0xff]
        %v921 = vld [vmem:[%s805 + $0x30] sm:$0xff]
        %v922 = vld [vmem:[%s805 + $0x38] sm:$0xff]
        %v923 = vld [vmem:[%s805 + $0x40] sm:$0xff]
        %v924 = vld [vmem:[%s805 + $0x48] sm:$0xff]
        %v925 = vld [vmem:[%s805 + $0x50] sm:$0xff]
        %v926 = vld [vmem:[%s805 + $0x58] sm:$0xff]
        %v927 = vld [vmem:[%s805 + $0x60] sm:$0xff]
        %v928 = vld [vmem:[%s805 + $0x68] sm:$0xff]
        %v929 = vld [vmem:[%s805 + $0x70] sm:$0xff]
        %v930 = vld [vmem:[%s805 + $0x78] sm:$0xff]
        %v931 = vlaneseq
        %v932 = vand.u32 %v931, 127
        %933 = vset.pattern.permute.xlu0 0
        %934 = vperm.xlu0 %933, %v915
        %v935 = vpop.permute.xlu0 %934
        %936 = vset.pattern.permute.xlu0 0
        %937 = vperm.xlu0 %936, %v916
        %v938 = vpop.permute.xlu0 %937
        %939 = vset.pattern.permute.xlu0 0
        %940 = vperm.xlu0 %939, %v917
        %v941 = vpop.permute.xlu0 %940
        %942 = vset.pattern.permute.xlu0 0
        %943 = vperm.xlu0 %942, %v918
        %v944 = vpop.permute.xlu0 %943
        %945 = vset.pattern.permute.xlu0 0
        %946 = vperm.xlu0 %945, %v919
        %v947 = vpop.permute.xlu0 %946
        %948 = vset.pattern.permute.xlu0 0
        %949 = vperm.xlu0 %948, %v920
        %v950 = vpop.permute.xlu0 %949
        %951 = vset.pattern.permute.xlu0 0
        %952 = vperm.xlu0 %951, %v921
        %v953 = vpop.permute.xlu0 %952
        %954 = vset.pattern.permute.xlu0 0
        %955 = vperm.xlu0 %954, %v922
        %v956 = vpop.permute.xlu0 %955
        %957 = vset.pattern.permute.xlu0 0
        %958 = vperm.xlu0 %957, %v923
        %v959 = vpop.permute.xlu0 %958
        %960 = vset.pattern.permute.xlu0 0
        %961 = vperm.xlu0 %960, %v924
        %v962 = vpop.permute.xlu0 %961
        %963 = vset.pattern.permute.xlu0 0
        %964 = vperm.xlu0 %963, %v925
        %v965 = vpop.permute.xlu0 %964
        %966 = vset.pattern.permute.xlu0 0
        %967 = vperm.xlu0 %966, %v926
        %v968 = vpop.permute.xlu0 %967
        %969 = vset.pattern.permute.xlu0 0
        %970 = vperm.xlu0 %969, %v927
        %v971 = vpop.permute.xlu0 %970
        %972 = vset.pattern.permute.xlu0 0
        %973 = vperm.xlu0 %972, %v928
        %v974 = vpop.permute.xlu0 %973
        %975 = vset.pattern.permute.xlu0 0
        %976 = vperm.xlu0 %975, %v929
        %v977 = vpop.permute.xlu0 %976
        %978 = vset.pattern.permute.xlu0 0
        %979 = vperm.xlu0 %978, %v930
        %v980 = vpop.permute.xlu0 %979
        %vm981 = vcmp.eq.s32.totalorder %v935, %v932
        %vm982 = vcmp.eq.s32.totalorder %v938, %v932
        %vm983 = vcmp.eq.s32.totalorder %v941, %v932
        %vm984 = vcmp.eq.s32.totalorder %v944, %v932
        %vm985 = vcmp.eq.s32.totalorder %v947, %v932
        %vm986 = vcmp.eq.s32.totalorder %v950, %v932
        %vm987 = vcmp.eq.s32.totalorder %v953, %v932
        %vm988 = vcmp.eq.s32.totalorder %v956, %v932
        %vm989 = vcmp.eq.s32.totalorder %v959, %v932
        %vm990 = vcmp.eq.s32.totalorder %v962, %v932
        %vm991 = vcmp.eq.s32.totalorder %v965, %v932
        %vm992 = vcmp.eq.s32.totalorder %v968, %v932
        %vm993 = vcmp.eq.s32.totalorder %v971, %v932
        %vm994 = vcmp.eq.s32.totalorder %v974, %v932
        %vm995 = vcmp.eq.s32.totalorder %v977, %v932
        %vm996 = vcmp.eq.s32.totalorder %v980, %v932
        %v997 = vsel %vm981, 1, 0
        %v998 = vsel %vm982, 1, 0
        %v999 = vsel %vm983, 1, 0
        %v1000 = vsel %vm984, 1, 0
        %v1001 = vsel %vm985, 1, 0
        %v1002 = vsel %vm986, 1, 0
        %v1003 = vsel %vm987, 1, 0
        %v1004 = vsel %vm988, 1, 0
        %v1005 = vsel %vm989, 1, 0
        %v1006 = vsel %vm990, 1, 0
        %v1007 = vsel %vm991, 1, 0
        %v1008 = vsel %vm992, 1, 0
        %v1009 = vsel %vm993, 1, 0
        %v1010 = vsel %vm994, 1, 0
        %v1011 = vsel %vm995, 1, 0
        %v1012 = vsel %vm996, 1, 0
        %v1013 = vcvt.s32.f32 %v997
        %v1014 = vcvt.s32.f32 %v998
        %v1015 = vcvt.s32.f32 %v999
        %v1016 = vcvt.s32.f32 %v1000
        %v1017 = vcvt.s32.f32 %v1001
        %v1018 = vcvt.s32.f32 %v1002
        %v1019 = vcvt.s32.f32 %v1003
        %v1020 = vcvt.s32.f32 %v1004
        %v1021 = vcvt.s32.f32 %v1005
        %v1022 = vcvt.s32.f32 %v1006
        %v1023 = vcvt.s32.f32 %v1007
        %v1024 = vcvt.s32.f32 %v1008
        %v1025 = vcvt.s32.f32 %v1009
        %v1026 = vcvt.s32.f32 %v1010
        %v1027 = vcvt.s32.f32 %v1011
        %v1028 = vcvt.s32.f32 %v1012
        %v1029 = vpack.c.bf16 %v1014, %v1013
        %v1030 = vpack.c.bf16 %v1016, %v1015
        %v1031 = vpack.c.bf16 %v1018, %v1017
        %v1032 = vpack.c.bf16 %v1020, %v1019
        %v1033 = vpack.c.bf16 %v1022, %v1021
        %v1034 = vpack.c.bf16 %v1024, %v1023
        %v1035 = vpack.c.bf16 %v1026, %v1025
        %v1036 = vpack.c.bf16 %v1028, %v1027
        %v1037 = vld [vmem:[%s808] sm:$0x1]
        %v1038 = vlaneseq
        %v1039 = vshrl.u32 %v1038, 7
        %v1040 = vadd.s32 %v1039, 8
        %v1041 = vadd.s32 %v1039, 16
        %v1042 = vadd.s32 %v1039, 24
        %v1043 = vadd.s32 %v1039, 32
        %v1044 = vadd.s32 %v1039, 40
        %v1045 = vadd.s32 %v1039, 48
        %v1046 = vadd.s32 %v1039, 56
        %v1047 = vadd.s32 %v1039, 64
        %v1048 = vadd.s32 %v1039, 72
        %v1049 = vadd.s32 %v1039, 80
        %v1050 = vadd.s32 %v1039, 88
        %v1051 = vadd.s32 %v1039, 96
        %v1052 = vadd.s32 %v1039, 104
        %v1053 = vadd.s32 %v1039, 112
        %v1054 = vadd.s32 %v1039, 120
        %v1055 = vperm.slane %v1037, 0
        %vm1056 = vcmp.eq.s32.totalorder %v1055, %v1039
        %vm1057 = vcmp.eq.s32.totalorder %v1055, %v1040
        %vm1058 = vcmp.eq.s32.totalorder %v1055, %v1041
        %vm1059 = vcmp.eq.s32.totalorder %v1055, %v1042
        %vm1060 = vcmp.eq.s32.totalorder %v1055, %v1043
        %vm1061 = vcmp.eq.s32.totalorder %v1055, %v1044
        %vm1062 = vcmp.eq.s32.totalorder %v1055, %v1045
        %vm1063 = vcmp.eq.s32.totalorder %v1055, %v1046
        %vm1064 = vcmp.eq.s32.totalorder %v1055, %v1047
        %vm1065 = vcmp.eq.s32.totalorder %v1055, %v1048
        %vm1066 = vcmp.eq.s32.totalorder %v1055, %v1049
        %vm1067 = vcmp.eq.s32.totalorder %v1055, %v1050
        %vm1068 = vcmp.eq.s32.totalorder %v1055, %v1051
        %vm1069 = vcmp.eq.s32.totalorder %v1055, %v1052
        %vm1070 = vcmp.eq.s32.totalorder %v1055, %v1053
        %vm1071 = vcmp.eq.s32.totalorder %v1055, %v1054
        %v1072 = vsel %vm1056, 1, 0
        %v1073 = vsel %vm1057, 1, 0
        %v1074 = vsel %vm1058, 1, 0
        %v1075 = vsel %vm1059, 1, 0
        %v1076 = vsel %vm1060, 1, 0
        %v1077 = vsel %vm1061, 1, 0
        %v1078 = vsel %vm1062, 1, 0
        %v1079 = vsel %vm1063, 1, 0
        %v1080 = vsel %vm1064, 1, 0
        %v1081 = vsel %vm1065, 1, 0
        %v1082 = vsel %vm1066, 1, 0
        %v1083 = vsel %vm1067, 1, 0
        %v1084 = vsel %vm1068, 1, 0
        %v1085 = vsel %vm1069, 1, 0
        %v1086 = vsel %vm1070, 1, 0
        %v1087 = vsel %vm1071, 1, 0
        %v1088 = vcvt.s32.f32 %v1072
        %v1089 = vcvt.s32.f32 %v1073
        %v1090 = vcvt.s32.f32 %v1074
        %v1091 = vcvt.s32.f32 %v1075
        %v1092 = vcvt.s32.f32 %v1076
        %v1093 = vcvt.s32.f32 %v1077
        %v1094 = vcvt.s32.f32 %v1078
        %v1095 = vcvt.s32.f32 %v1079
        %v1096 = vcvt.s32.f32 %v1080
        %v1097 = vcvt.s32.f32 %v1081
        %v1098 = vcvt.s32.f32 %v1082
        %v1099 = vcvt.s32.f32 %v1083
        %v1100 = vcvt.s32.f32 %v1084
        %v1101 = vcvt.s32.f32 %v1085
        %v1102 = vcvt.s32.f32 %v1086
        %v1103 = vcvt.s32.f32 %v1087
        %v1104 = vpack.c.bf16 %v1089, %v1088
        %v1105 = vpack.c.bf16 %v1091, %v1090
        %v1106 = vpack.c.bf16 %v1093, %v1092
        %v1107 = vpack.c.bf16 %v1095, %v1094
        %v1108 = vpack.c.bf16 %v1097, %v1096
        %v1109 = vpack.c.bf16 %v1099, %v1098
        %v1110 = vpack.c.bf16 %v1101, %v1100
        %v1111 = vpack.c.bf16 %v1103, %v1102
        %v1112 = vld [vmem:[%s813] sm:$0xff]
        %v1113 = vld [vmem:[%s813 + $0x8] sm:$0xff]
        %v1114 = vld [vmem:[%s813 + $0x10] sm:$0xff]
        %v1115 = vld [vmem:[%s813 + $0x18] sm:$0xff]
        %v1116 = vld [vmem:[%s813 + $0x20] sm:$0xff]
        %v1117 = vld [vmem:[%s813 + $0x28] sm:$0xff]
        %v1118 = vld [vmem:[%s813 + $0x30] sm:$0xff]
        %v1119 = vld [vmem:[%s813 + $0x38] sm:$0xff]
        %v1120 = vld [vmem:[%s813 + $0x40] sm:$0xff]
        %v1121 = vld [vmem:[%s813 + $0x48] sm:$0xff]
        %v1122 = vld [vmem:[%s813 + $0x50] sm:$0xff]
        %v1123 = vld [vmem:[%s813 + $0x58] sm:$0xff]
        %v1124 = vld [vmem:[%s813 + $0x60] sm:$0xff]
        %v1125 = vld [vmem:[%s813 + $0x68] sm:$0xff]
        %v1126 = vld [vmem:[%s813 + $0x70] sm:$0xff]
        %v1127 = vld [vmem:[%s813 + $0x78] sm:$0xff]
        %v1128 = vld [vmem:[#allocation5] sm:$0x1]
        %1130 = vset.pattern.permute.xlu0 0
        %1131 = vperm.xlu0 %1130, %v1112
        %v1132 = vpop.permute.xlu0 %1131
        %1135 = vset.pattern.permute.xlu0 0
        %1136 = vperm.xlu0 %1135, %v1113
        %v1137 = vpop.permute.xlu0 %1136
        %1140 = vset.pattern.permute.xlu0 0
        %1141 = vperm.xlu0 %1140, %v1114
        %v1142 = vpop.permute.xlu0 %1141
        %1145 = vset.pattern.permute.xlu0 0
        %1146 = vperm.xlu0 %1145, %v1115
        %v1147 = vpop.permute.xlu0 %1146
        %1150 = vset.pattern.permute.xlu0 0
        %1151 = vperm.xlu0 %1150, %v1116
        %v1152 = vpop.permute.xlu0 %1151
        %1155 = vset.pattern.permute.xlu0 0
        %1156 = vperm.xlu0 %1155, %v1117
        %v1157 = vpop.permute.xlu0 %1156
        %1160 = vset.pattern.permute.xlu0 0
        %1161 = vperm.xlu0 %1160, %v1118
        %v1162 = vpop.permute.xlu0 %1161
        %1165 = vset.pattern.permute.xlu0 0
        %1166 = vperm.xlu0 %1165, %v1119
        %v1167 = vpop.permute.xlu0 %1166
        %1170 = vset.pattern.permute.xlu0 0
        %1171 = vperm.xlu0 %1170, %v1120
        %v1172 = vpop.permute.xlu0 %1171
        %1175 = vset.pattern.permute.xlu0 0
        %1176 = vperm.xlu0 %1175, %v1121
        %v1177 = vpop.permute.xlu0 %1176
        %1180 = vset.pattern.permute.xlu0 0
        %1181 = vperm.xlu0 %1180, %v1122
        %v1182 = vpop.permute.xlu0 %1181
        %1185 = vset.pattern.permute.xlu0 0
        %1186 = vperm.xlu0 %1185, %v1123
        %v1187 = vpop.permute.xlu0 %1186
        %1190 = vset.pattern.permute.xlu0 0
        %1191 = vperm.xlu0 %1190, %v1124
        %v1192 = vpop.permute.xlu0 %1191
        %1195 = vset.pattern.permute.xlu0 0
        %1196 = vperm.xlu0 %1195, %v1125
        %v1197 = vpop.permute.xlu0 %1196
        %1200 = vset.pattern.permute.xlu0 0
        %1201 = vperm.xlu0 %1200, %v1126
        %v1202 = vpop.permute.xlu0 %1201
        %1205 = vset.pattern.permute.xlu0 0
        %1206 = vperm.xlu0 %1205, %v1127
        %v1207 = vpop.permute.xlu0 %1206
        %v1210 = vperm.slane %v1128, 0
        %v1212 = vsub.f32 %v1132, %v1210
        %v1213 = vsub.f32 %v1137, %v1210
        %v1214 = vsub.f32 %v1142, %v1210
        %v1215 = vsub.f32 %v1147, %v1210
        %v1216 = vsub.f32 %v1152, %v1210
        %v1217 = vsub.f32 %v1157, %v1210
        %v1218 = vsub.f32 %v1162, %v1210
        %v1219 = vsub.f32 %v1167, %v1210
        %v1220 = vsub.f32 %v1172, %v1210
        %v1221 = vsub.f32 %v1177, %v1210
        %v1222 = vsub.f32 %v1182, %v1210
        %v1223 = vsub.f32 %v1187, %v1210
        %v1224 = vsub.f32 %v1192, %v1210
        %v1225 = vsub.f32 %v1197, %v1210
        %v1226 = vsub.f32 %v1202, %v1210
        %v1227 = vsub.f32 %v1207, %v1210
        %v1228 = vmul.f32 %v1212, %v1212
        %v1229 = vmul.f32 %v1213, %v1213
        %v1230 = vmul.f32 %v1214, %v1214
        %v1231 = vmul.f32 %v1215, %v1215
        %v1232 = vmul.f32 %v1216, %v1216
        %v1233 = vmul.f32 %v1217, %v1217
        %v1234 = vmul.f32 %v1218, %v1218
        %v1235 = vmul.f32 %v1219, %v1219
        %v1236 = vmul.f32 %v1220, %v1220
        %v1237 = vmul.f32 %v1221, %v1221
        %v1238 = vmul.f32 %v1222, %v1222
        %v1239 = vmul.f32 %v1223, %v1223
        %v1240 = vmul.f32 %v1224, %v1224
        %v1241 = vmul.f32 %v1225, %v1225
        %v1242 = vmul.f32 %v1226, %v1226
        %v1243 = vmul.f32 %v1227, %v1227
        %v1244 = vmul.f32 %v1228, -10.0
        %v1245 = vmul.f32 %v1229, -10.0
        %v1246 = vmul.f32 %v1230, -10.0
        %v1247 = vmul.f32 %v1231, -10.0
        %v1248 = vmul.f32 %v1232, -10.0
        %v1249 = vmul.f32 %v1233, -10.0
        %v1250 = vmul.f32 %v1234, -10.0
        %v1251 = vmul.f32 %v1235, -10.0
        %v1252 = vmul.f32 %v1236, -10.0
        %v1253 = vmul.f32 %v1237, -10.0
        %v1254 = vmul.f32 %v1238, -10.0
        %v1255 = vmul.f32 %v1239, -10.0
        %v1256 = vmul.f32 %v1240, -10.0
        %v1257 = vmul.f32 %v1241, -10.0
        %v1258 = vmul.f32 %v1242, -10.0
        %v1259 = vmul.f32 %v1243, -10.0
        %v1260 = vmul.f32 %v1244, 1.442695
        %v1261 = vpow.pop %v1260
        %v1262 = vmul.f32 %v1245, 1.442695
        %v1263 = vpow.pop %v1262
        %v1264 = vmul.f32 %v1246, 1.442695
        %v1265 = vpow.pop %v1264
        %v1266 = vmul.f32 %v1247, 1.442695
        %v1267 = vpow.pop %v1266
        %v1268 = vmul.f32 %v1248, 1.442695
        %v1269 = vpow.pop %v1268
        %v1270 = vmul.f32 %v1249, 1.442695
        %v1271 = vpow.pop %v1270
        %v1272 = vmul.f32 %v1250, 1.442695
        %v1273 = vpow.pop %v1272
        %v1274 = vmul.f32 %v1251, 1.442695
        %v1275 = vpow.pop %v1274
        %v1276 = vmul.f32 %v1252, 1.442695
        %v1277 = vpow.pop %v1276
        %v1278 = vmul.f32 %v1253, 1.442695
        %v1279 = vpow.pop %v1278
        %v1280 = vmul.f32 %v1254, 1.442695
        %v1281 = vpow.pop %v1280
        %v1282 = vmul.f32 %v1255, 1.442695
        %v1283 = vpow.pop %v1282
        %v1284 = vmul.f32 %v1256, 1.442695
        %v1285 = vpow.pop %v1284
        %v1286 = vmul.f32 %v1257, 1.442695
        %v1287 = vpow.pop %v1286
        %v1288 = vmul.f32 %v1258, 1.442695
        %v1289 = vpow.pop %v1288
        %v1290 = vmul.f32 %v1259, 1.442695
        %v1291 = vpow.pop %v1290
        %v1292 = vld [vmem:[%s8] sm:$0xff]
        %v1293 = vld [vmem:[%s8 + $0x8] sm:$0xff]
        %v1294 = vld [vmem:[%s8 + $0x10] sm:$0xff]
        %v1295 = vld [vmem:[%s8 + $0x18] sm:$0xff]
        %v1296 = vld [vmem:[%s8 + $0x20] sm:$0xff]
        %v1297 = vld [vmem:[%s8 + $0x28] sm:$0xff]
        %v1298 = vld [vmem:[%s8 + $0x30] sm:$0xff]
        %v1299 = vld [vmem:[%s8 + $0x38] sm:$0xff]
        %v1300 = vld [vmem:[%s8 + $0x40] sm:$0xff]
        %v1301 = vld [vmem:[%s8 + $0x48] sm:$0xff]
        %v1302 = vld [vmem:[%s8 + $0x50] sm:$0xff]
        %v1303 = vld [vmem:[%s8 + $0x58] sm:$0xff]
        %v1304 = vld [vmem:[%s8 + $0x60] sm:$0xff]
        %v1305 = vld [vmem:[%s8 + $0x68] sm:$0xff]
        %v1306 = vld [vmem:[%s8 + $0x70] sm:$0xff]
        %v1307 = vld [vmem:[%s8 + $0x78] sm:$0xff]
        %v1308 = vld [vmem:[%s9] sm:$0x1]
        %v1310 = vperm.slane %v1308, 0
        %1312 = vmatpush.msra.mxu0 %v1307
        %1313 = vmatpush.msra.mxu0 %v1306
        %1314 = vmatpush.msra.mxu0 %v1305
        %1315 = vmatpush.msra.mxu0 %v1304
        %1316 = vmatpush.msra.mxu0 %v1303
        %1317 = vmatpush.msra.mxu0 %v1302
        %1318 = vmatpush.msra.mxu0 %v1301
        %1319 = vmatpush.msra.mxu0 %v1300
        %1320 = vmatpush.msra.mxu0 %v1299
        %1321 = vmatpush.msra.mxu0 %v1298
        %1322 = vmatpush.msra.mxu0 %v1297
        %1323 = vmatpush.msra.mxu0 %v1296
        %1324 = vmatpush.msra.mxu0 %v1295
        %1325 = vmatpush.msra.mxu0 %v1294
        %1326 = vmatpush.msra.mxu0 %v1293
        %1327 = vmatpush.msra.mxu0 %v1292
        %1328 = vmatmul.f32.gmra.mxu0 %v1261
        %v1329 = vpop.f32.mrf.mxu0
        %v1330 = vadd.f32 %v1310, %v1329
        %1331 = vmatmul.f32.gmra.mxu0 %v1263
        %v1332 = vpop.f32.mrf.mxu0
        %v1333 = vadd.f32 %v1310, %v1332
        %1334 = vmatmul.f32.gmra.mxu0 %v1265
        %v1335 = vpop.f32.mrf.mxu0
        %v1336 = vadd.f32 %v1310, %v1335
        %1337 = vmatmul.f32.gmra.mxu0 %v1267
        %v1338 = vpop.f32.mrf.mxu0
        %v1339 = vadd.f32 %v1310, %v1338
        %1340 = vmatmul.f32.gmra.mxu0 %v1269
        %v1341 = vpop.f32.mrf.mxu0
        %v1342 = vadd.f32 %v1310, %v1341
        %1343 = vmatmul.f32.gmra.mxu0 %v1271
        %v1344 = vpop.f32.mrf.mxu0
        %v1345 = vadd.f32 %v1310, %v1344
        %1346 = vmatmul.f32.gmra.mxu0 %v1273
        %v1347 = vpop.f32.mrf.mxu0
        %v1348 = vadd.f32 %v1310, %v1347
        %1349 = vmatmul.f32.gmra.mxu0 %v1275
        %v1350 = vpop.f32.mrf.mxu0
        %v1351 = vadd.f32 %v1310, %v1350
        %1352 = vmatmul.f32.gmra.mxu0 %v1277
        %v1353 = vpop.f32.mrf.mxu0
        %v1354 = vadd.f32 %v1310, %v1353
        %1355 = vmatmul.f32.gmra.mxu0 %v1279
        %v1356 = vpop.f32.mrf.mxu0
        %v1357 = vadd.f32 %v1310, %v1356
        %1358 = vmatmul.f32.gmra.mxu0 %v1281
        %v1359 = vpop.f32.mrf.mxu0
        %v1360 = vadd.f32 %v1310, %v1359
        %1361 = vmatmul.f32.gmra.mxu0 %v1283
        %v1362 = vpop.f32.mrf.mxu0
        %v1363 = vadd.f32 %v1310, %v1362
        %1364 = vmatmul.f32.gmra.mxu0 %v1285
        %v1365 = vpop.f32.mrf.mxu0
        %v1366 = vadd.f32 %v1310, %v1365
        %1367 = vmatmul.f32.gmra.mxu0 %v1287
        %v1368 = vpop.f32.mrf.mxu0
        %v1369 = vadd.f32 %v1310, %v1368
        %1370 = vmatmul.f32.gmra.mxu0 %v1289
        %v1371 = vpop.f32.mrf.mxu0
        %v1372 = vadd.f32 %v1310, %v1371
        %1373 = vmatmul.f32.gmra.mxu0 %v1291
        %v1374 = vpop.f32.mrf.mxu0
        %v1375 = vadd.f32 %v1310, %v1374
        %1376 = vdwg.mxu0
        %v1377 = vmax.f32 %v1330, 0.0
        %v1378 = vmax.f32 %v1333, 0.0
        %v1379 = vmax.f32 %v1336, 0.0
        %v1380 = vmax.f32 %v1339, 0.0
        %v1381 = vmax.f32 %v1342, 0.0
        %v1382 = vmax.f32 %v1345, 0.0
        %v1383 = vmax.f32 %v1348, 0.0
        %v1384 = vmax.f32 %v1351, 0.0
        %v1385 = vmax.f32 %v1354, 0.0
        %v1386 = vmax.f32 %v1357, 0.0
        %v1387 = vmax.f32 %v1360, 0.0
        %v1388 = vmax.f32 %v1363, 0.0
        %v1389 = vmax.f32 %v1366, 0.0
        %v1390 = vmax.f32 %v1369, 0.0
        %v1391 = vmax.f32 %v1372, 0.0
        %v1392 = vmax.f32 %v1375, 0.0
        %v1393 = vand.u32 2147483647, %v1330
        %v1394 = vand.u32 2147483647, %v1333
        %v1395 = vand.u32 2147483647, %v1336
        %v1396 = vand.u32 2147483647, %v1339
        %v1397 = vand.u32 2147483647, %v1342
        %v1398 = vand.u32 2147483647, %v1345
        %v1399 = vand.u32 2147483647, %v1348
        %v1400 = vand.u32 2147483647, %v1351
        %v1401 = vand.u32 2147483647, %v1354
        %v1402 = vand.u32 2147483647, %v1357
        %v1403 = vand.u32 2147483647, %v1360
        %v1404 = vand.u32 2147483647, %v1363
        %v1405 = vand.u32 2147483647, %v1366
        %v1406 = vand.u32 2147483647, %v1369
        %v1407 = vand.u32 2147483647, %v1372
        %v1408 = vand.u32 2147483647, %v1375
        %v1409 = vsub.f32 0.0, %v1393
        %v1410 = vsub.f32 0.0, %v1394
        %v1411 = vsub.f32 0.0, %v1395
        %v1412 = vsub.f32 0.0, %v1396
        %v1413 = vsub.f32 0.0, %v1397
        %v1414 = vsub.f32 0.0, %v1398
        %v1415 = vsub.f32 0.0, %v1399
        %v1416 = vsub.f32 0.0, %v1400
        %v1417 = vsub.f32 0.0, %v1401
        %v1418 = vsub.f32 0.0, %v1402
        %v1419 = vsub.f32 0.0, %v1403
        %v1420 = vsub.f32 0.0, %v1404
        %v1421 = vsub.f32 0.0, %v1405
        %v1422 = vsub.f32 0.0, %v1406
        %v1423 = vsub.f32 0.0, %v1407
        %v1424 = vsub.f32 0.0, %v1408
        %v1425 = vmul.f32 %v1409, 1.442695
        %v1426 = vpow.pop %v1425
        %v1427 = vmul.f32 %v1410, 1.442695
        %v1428 = vpow.pop %v1427
        %v1429 = vmul.f32 %v1411, 1.442695
        %v1430 = vpow.pop %v1429
        %v1431 = vmul.f32 %v1412, 1.442695
        %v1432 = vpow.pop %v1431
        %v1433 = vmul.f32 %v1413, 1.442695
        %v1434 = vpow.pop %v1433
        %v1435 = vmul.f32 %v1414, 1.442695
        %v1436 = vpow.pop %v1435
        %v1437 = vmul.f32 %v1415, 1.442695
        %v1438 = vpow.pop %v1437
        %v1439 = vmul.f32 %v1416, 1.442695
        %v1440 = vpow.pop %v1439
        %v1441 = vmul.f32 %v1417, 1.442695
        %v1442 = vpow.pop %v1441
        %v1443 = vmul.f32 %v1418, 1.442695
        %v1444 = vpow.pop %v1443
        %v1445 = vmul.f32 %v1419, 1.442695
        %v1446 = vpow.pop %v1445
        %v1447 = vmul.f32 %v1420, 1.442695
        %v1448 = vpow.pop %v1447
        %v1449 = vmul.f32 %v1421, 1.442695
        %v1450 = vpow.pop %v1449
        %v1451 = vmul.f32 %v1422, 1.442695
        %v1452 = vpow.pop %v1451
        %v1453 = vmul.f32 %v1423, 1.442695
        %v1454 = vpow.pop %v1453
        %v1455 = vmul.f32 %v1424, 1.442695
        %v1456 = vpow.pop %v1455
        %v1457 = vadd.f32 %v1426, 1.0
        %v1458 = vadd.f32 %v1428, 1.0
        %v1459 = vadd.f32 %v1430, 1.0
        %v1460 = vadd.f32 %v1432, 1.0
        %v1461 = vadd.f32 %v1434, 1.0
        %v1462 = vadd.f32 %v1436, 1.0
        %v1463 = vadd.f32 %v1438, 1.0
        %v1464 = vadd.f32 %v1440, 1.0
        %v1465 = vadd.f32 %v1442, 1.0
        %v1466 = vadd.f32 %v1444, 1.0
        %v1467 = vadd.f32 %v1446, 1.0
        %v1468 = vadd.f32 %v1448, 1.0
        %v1469 = vadd.f32 %v1450, 1.0
        %v1470 = vadd.f32 %v1452, 1.0
        %v1471 = vadd.f32 %v1454, 1.0
        %v1472 = vadd.f32 %v1456, 1.0
        %v1473 = vlog2.pop %v1457
        %v1474 = vmul.f32 %v1473, 0.6931472
        %v1475 = vlog2.pop %v1458
        %v1476 = vmul.f32 %v1475, 0.6931472
        %v1477 = vlog2.pop %v1459
        %v1478 = vmul.f32 %v1477, 0.6931472
        %v1479 = vlog2.pop %v1460
        %v1480 = vmul.f32 %v1479, 0.6931472
        %v1481 = vlog2.pop %v1461
        %v1482 = vmul.f32 %v1481, 0.6931472
        %v1483 = vlog2.pop %v1462
        %v1484 = vmul.f32 %v1483, 0.6931472
        %v1485 = vlog2.pop %v1463
        %v1486 = vmul.f32 %v1485, 0.6931472
        %v1487 = vlog2.pop %v1464
        %v1488 = vmul.f32 %v1487, 0.6931472
        %v1489 = vlog2.pop %v1465
        %v1490 = vmul.f32 %v1489, 0.6931472
        %v1491 = vlog2.pop %v1466
        %v1492 = vmul.f32 %v1491, 0.6931472
        %v1493 = vlog2.pop %v1467
        %v1494 = vmul.f32 %v1493, 0.6931472
        %v1495 = vlog2.pop %v1468
        %v1496 = vmul.f32 %v1495, 0.6931472
        %v1497 = vlog2.pop %v1469
        %v1498 = vmul.f32 %v1497, 0.6931472
        %v1499 = vlog2.pop %v1470
        %v1500 = vmul.f32 %v1499, 0.6931472
        %v1501 = vlog2.pop %v1471
        %v1502 = vmul.f32 %v1501, 0.6931472
        %v1503 = vlog2.pop %v1472
        %v1504 = vmul.f32 %v1503, 0.6931472
        %v1505 = vadd.f32 %v1377, %v1474
        %v1506 = vadd.f32 %v1378, %v1476
        %v1507 = vadd.f32 %v1379, %v1478
        %v1508 = vadd.f32 %v1380, %v1480
        %v1509 = vadd.f32 %v1381, %v1482
        %v1510 = vadd.f32 %v1382, %v1484
        %v1511 = vadd.f32 %v1383, %v1486
        %v1512 = vadd.f32 %v1384, %v1488
        %v1513 = vadd.f32 %v1385, %v1490
        %v1514 = vadd.f32 %v1386, %v1492
        %v1515 = vadd.f32 %v1387, %v1494
        %v1516 = vadd.f32 %v1388, %v1496
        %v1517 = vadd.f32 %v1389, %v1498
        %v1518 = vadd.f32 %v1390, %v1500
        %v1519 = vadd.f32 %v1391, %v1502
        %v1520 = vadd.f32 %v1392, %v1504
        %v1521 = vsub.f32 %v1505, 0.6931472
        %v1522 = vsub.f32 %v1506, 0.6931472
        %v1523 = vsub.f32 %v1507, 0.6931472
        %v1524 = vsub.f32 %v1508, 0.6931472
        %v1525 = vsub.f32 %v1509, 0.6931472
        %v1526 = vsub.f32 %v1510, 0.6931472
        %v1527 = vsub.f32 %v1511, 0.6931472
        %v1528 = vsub.f32 %v1512, 0.6931472
        %v1529 = vsub.f32 %v1513, 0.6931472
        %v1530 = vsub.f32 %v1514, 0.6931472
        %v1531 = vsub.f32 %v1515, 0.6931472
        %v1532 = vsub.f32 %v1516, 0.6931472
        %v1533 = vsub.f32 %v1517, 0.6931472
        %v1534 = vsub.f32 %v1518, 0.6931472
        %v1535 = vsub.f32 %v1519, 0.6931472
        %v1536 = vsub.f32 %v1520, 0.6931472
        %v1537 = vld [vmem:[#allocation7] sm:$0xff]
        %v1538 = vld [vmem:[#allocation7 + $0x8] sm:$0xff]
        %v1539 = vld [vmem:[#allocation7 + $0x10] sm:$0xff]
        %v1540 = vld [vmem:[#allocation7 + $0x18] sm:$0xff]
        %v1541 = vld [vmem:[#allocation7 + $0x20] sm:$0xff]
        %v1542 = vld [vmem:[#allocation7 + $0x28] sm:$0xff]
        %v1543 = vld [vmem:[#allocation7 + $0x30] sm:$0xff]
        %v1544 = vld [vmem:[#allocation7 + $0x38] sm:$0xff]
        %v1545 = vld [vmem:[#allocation7 + $0x40] sm:$0xff]
        %v1546 = vld [vmem:[#allocation7 + $0x48] sm:$0xff]
        %v1547 = vld [vmem:[#allocation7 + $0x50] sm:$0xff]
        %v1548 = vld [vmem:[#allocation7 + $0x58] sm:$0xff]
        %v1549 = vld [vmem:[#allocation7 + $0x60] sm:$0xff]
        %v1550 = vld [vmem:[#allocation7 + $0x68] sm:$0xff]
        %v1551 = vld [vmem:[#allocation7 + $0x70] sm:$0xff]
        %v1552 = vld [vmem:[#allocation7 + $0x78] sm:$0xff]
        %v1553 = vld [vmem:[%s11] sm:$0x1]
        %v1555 = vperm.slane %v1553, 0
        %1557 = vmatpush.msra.mxu0 %v1552
        %1558 = vmatpush.msra.mxu0 %v1551
        %1559 = vmatpush.msra.mxu0 %v1550
        %1560 = vmatpush.msra.mxu0 %v1549
        %1561 = vmatpush.msra.mxu0 %v1548
        %1562 = vmatpush.msra.mxu0 %v1547
        %1563 = vmatpush.msra.mxu0 %v1546
        %1564 = vmatpush.msra.mxu0 %v1545
        %1565 = vmatpush.msra.mxu0 %v1544
        %1566 = vmatpush.msra.mxu0 %v1543
        %1567 = vmatpush.msra.mxu0 %v1542
        %1568 = vmatpush.msra.mxu0 %v1541
        %1569 = vmatpush.msra.mxu0 %v1540
        %1570 = vmatpush.msra.mxu0 %v1539
        %1571 = vmatpush.msra.mxu0 %v1538
        %1572 = vmatpush.msra.mxu0 %v1537
        %1573 = vmatmul.f32.gmra.mxu0 %v1521
        %v1574 = vpop.f32.mrf.mxu0
        %v1575 = vadd.f32 %v1555, %v1574
        %1576 = vmatmul.f32.gmra.mxu0 %v1522
        %v1577 = vpop.f32.mrf.mxu0
        %v1578 = vadd.f32 %v1555, %v1577
        %1579 = vmatmul.f32.gmra.mxu0 %v1523
        %v1580 = vpop.f32.mrf.mxu0
        %v1581 = vadd.f32 %v1555, %v1580
        %1582 = vmatmul.f32.gmra.mxu0 %v1524
        %v1583 = vpop.f32.mrf.mxu0
        %v1584 = vadd.f32 %v1555, %v1583
        %1585 = vmatmul.f32.gmra.mxu0 %v1525
        %v1586 = vpop.f32.mrf.mxu0
        %v1587 = vadd.f32 %v1555, %v1586
        %1588 = vmatmul.f32.gmra.mxu0 %v1526
        %v1589 = vpop.f32.mrf.mxu0
        %v1590 = vadd.f32 %v1555, %v1589
        %1591 = vmatmul.f32.gmra.mxu0 %v1527
        %v1592 = vpop.f32.mrf.mxu0
        %v1593 = vadd.f32 %v1555, %v1592
        %1594 = vmatmul.f32.gmra.mxu0 %v1528
        %v1595 = vpop.f32.mrf.mxu0
        %v1596 = vadd.f32 %v1555, %v1595
        %1597 = vmatmul.f32.gmra.mxu0 %v1529
        %v1598 = vpop.f32.mrf.mxu0
        %v1599 = vadd.f32 %v1555, %v1598
        %1600 = vmatmul.f32.gmra.mxu0 %v1530
        %v1601 = vpop.f32.mrf.mxu0
        %v1602 = vadd.f32 %v1555, %v1601
        %1603 = vmatmul.f32.gmra.mxu0 %v1531
        %v1604 = vpop.f32.mrf.mxu0
        %v1605 = vadd.f32 %v1555, %v1604
        %1606 = vmatmul.f32.gmra.mxu0 %v1532
        %v1607 = vpop.f32.mrf.mxu0
        %v1608 = vadd.f32 %v1555, %v1607
        %1609 = vmatmul.f32.gmra.mxu0 %v1533
        %v1610 = vpop.f32.mrf.mxu0
        %v1611 = vadd.f32 %v1555, %v1610
        %1612 = vmatmul.f32.gmra.mxu0 %v1534
        %v1613 = vpop.f32.mrf.mxu0
        %v1614 = vadd.f32 %v1555, %v1613
        %1615 = vmatmul.f32.gmra.mxu0 %v1535
        %v1616 = vpop.f32.mrf.mxu0
        %v1617 = vadd.f32 %v1555, %v1616
        %1618 = vmatmul.f32.gmra.mxu0 %v1536
        %v1619 = vpop.f32.mrf.mxu0
        %v1620 = vadd.f32 %v1555, %v1619
        %1621 = vdwg.mxu0
        %v1622 = vpack.c.bf16 %v871, %v868
        %v1623 = vpack.c.bf16 %v877, %v874
        %v1624 = vpack.c.bf16 %v883, %v880
        %v1625 = vpack.c.bf16 %v889, %v886
        %v1626 = vpack.c.bf16 %v895, %v892
        %v1627 = vpack.c.bf16 %v901, %v898
        %v1628 = vpack.c.bf16 %v907, %v904
        %v1629 = vpack.c.bf16 %v913, %v910
        %1630 = vmatpush.bf16.msra.mxu0 %v1629
        %1631 = vmatpush.bf16.msra.mxu0 %v1628
        %1632 = vmatpush.bf16.msra.mxu0 %v1627
        %1633 = vmatpush.bf16.msra.mxu0 %v1626
        %1634 = vmatpush.bf16.msra.mxu0 %v1625
        %1635 = vmatpush.bf16.msra.mxu0 %v1624
        %1636 = vmatpush.bf16.msra.mxu0 %v1623
        %1637 = vmatpush.bf16.msra.mxu0 %v1622
        %1638 = vmatmul.bf16.gmra.mxu0 %v1029
        %v1639 = vpop.f32.mrf.mxu0
        %v1640 = vadd.f32 0.0, %v1639
        %v1641 = vpop.f32.mrf.mxu0
        %v1642 = vadd.f32 0.0, %v1641
        %1643 = vmatmul.bf16.gmra.mxu0 %v1030
        %v1644 = vpop.f32.mrf.mxu0
        %v1645 = vadd.f32 0.0, %v1644
        %v1646 = vpop.f32.mrf.mxu0
        %v1647 = vadd.f32 0.0, %v1646
        %1648 = vmatmul.bf16.gmra.mxu0 %v1031
        %v1649 = vpop.f32.mrf.mxu0
        %v1650 = vadd.f32 0.0, %v1649
        %v1651 = vpop.f32.mrf.mxu0
        %v1652 = vadd.f32 0.0, %v1651
        %1653 = vmatmul.bf16.gmra.mxu0 %v1032
        %v1654 = vpop.f32.mrf.mxu0
        %v1655 = vadd.f32 0.0, %v1654
        %v1656 = vpop.f32.mrf.mxu0
        %v1657 = vadd.f32 0.0, %v1656
        %1658 = vmatmul.bf16.gmra.mxu0 %v1033
        %v1659 = vpop.f32.mrf.mxu0
        %v1660 = vadd.f32 0.0, %v1659
        %v1661 = vpop.f32.mrf.mxu0
        %v1662 = vadd.f32 0.0, %v1661
        %1663 = vmatmul.bf16.gmra.mxu0 %v1034
        %v1664 = vpop.f32.mrf.mxu0
        %v1665 = vadd.f32 0.0, %v1664
        %v1666 = vpop.f32.mrf.mxu0
        %v1667 = vadd.f32 0.0, %v1666
        %1668 = vmatmul.bf16.gmra.mxu0 %v1035
        %v1669 = vpop.f32.mrf.mxu0
        %v1670 = vadd.f32 0.0, %v1669
        %v1671 = vpop.f32.mrf.mxu0
        %v1672 = vadd.f32 0.0, %v1671
        %1673 = vmatmul.bf16.gmra.mxu0 %v1036
        %v1674 = vpop.f32.mrf.mxu0
        %v1675 = vadd.f32 0.0, %v1674
        %v1676 = vpop.f32.mrf.mxu0
        %v1677 = vadd.f32 0.0, %v1676
        %1678 = vdwg.mxu0
        %v1679 = vmul.f32 %v1640, %v1575
        %v1680 = vmul.f32 %v1642, %v1578
        %v1681 = vmul.f32 %v1645, %v1581
        %v1682 = vmul.f32 %v1647, %v1584
        %v1683 = vmul.f32 %v1650, %v1587
        %v1684 = vmul.f32 %v1652, %v1590
        %v1685 = vmul.f32 %v1655, %v1593
        %v1686 = vmul.f32 %v1657, %v1596
        %v1687 = vmul.f32 %v1660, %v1599
        %v1688 = vmul.f32 %v1662, %v1602
        %v1689 = vmul.f32 %v1665, %v1605
        %v1690 = vmul.f32 %v1667, %v1608
        %v1691 = vmul.f32 %v1670, %v1611
        %v1692 = vmul.f32 %v1672, %v1614
        %v1693 = vmul.f32 %v1675, %v1617
        %v1694 = vmul.f32 %v1677, %v1620
        %v1695 = vpack.c.bf16 %v1680, %v1679
        %v1696 = vpack.c.bf16 %v1682, %v1681
        %v1697 = vpack.c.bf16 %v1684, %v1683
        %v1698 = vpack.c.bf16 %v1686, %v1685
        %v1699 = vpack.c.bf16 %v1688, %v1687
        %v1700 = vpack.c.bf16 %v1690, %v1689
        %v1701 = vpack.c.bf16 %v1692, %v1691
        %v1702 = vpack.c.bf16 %v1694, %v1693
        %1703 = vmatpush.bf16.msra.mxu0 %v1702
        %1704 = vmatpush.bf16.msra.mxu0 %v1701
        %1705 = vmatpush.bf16.msra.mxu0 %v1700
        %1706 = vmatpush.bf16.msra.mxu0 %v1699
        %1707 = vmatpush.bf16.msra.mxu0 %v1698
        %1708 = vmatpush.bf16.msra.mxu0 %v1697
        %1709 = vmatpush.bf16.msra.mxu0 %v1696
        %1710 = vmatpush.bf16.msra.mxu0 %v1695
        %1711 = vmatmul.bf16.gmra.mxu0 %v1104
        %v1712 = vpop.f32.mrf.mxu0
        %v1713 = vadd.f32 0.0, %v1712
        %v1714 = vpop.f32.mrf.mxu0
        %v1715 = vadd.f32 0.0, %v1714
        %1716 = vmatmul.bf16.gmra.mxu0 %v1105
        %v1717 = vpop.f32.mrf.mxu0
        %v1718 = vadd.f32 0.0, %v1717
        %v1719 = vpop.f32.mrf.mxu0
        %v1720 = vadd.f32 0.0, %v1719
        %1721 = vmatmul.bf16.gmra.mxu0 %v1106
        %v1722 = vpop.f32.mrf.mxu0
        %v1723 = vadd.f32 0.0, %v1722
        %v1724 = vpop.f32.mrf.mxu0
        %v1725 = vadd.f32 0.0, %v1724
        %1726 = vmatmul.bf16.gmra.mxu0 %v1107
        %v1727 = vpop.f32.mrf.mxu0
        %v1728 = vadd.f32 0.0, %v1727
        %v1729 = vpop.f32.mrf.mxu0
        %v1730 = vadd.f32 0.0, %v1729
        %1731 = vmatmul.bf16.gmra.mxu0 %v1108
        %v1732 = vpop.f32.mrf.mxu0
        %v1733 = vadd.f32 0.0, %v1732
        %v1734 = vpop.f32.mrf.mxu0
        %v1735 = vadd.f32 0.0, %v1734
        %1736 = vmatmul.bf16.gmra.mxu0 %v1109
        %v1737 = vpop.f32.mrf.mxu0
        %v1738 = vadd.f32 0.0, %v1737
        %v1739 = vpop.f32.mrf.mxu0
        %v1740 = vadd.f32 0.0, %v1739
        %1741 = vmatmul.bf16.gmra.mxu0 %v1110
        %v1742 = vpop.f32.mrf.mxu0
        %v1743 = vadd.f32 0.0, %v1742
        %v1744 = vpop.f32.mrf.mxu0
        %v1745 = vadd.f32 0.0, %v1744
        %1746 = vmatmul.bf16.gmra.mxu0 %v1111
        %v1747 = vpop.f32.mrf.mxu0
        %v1748 = vadd.f32 0.0, %v1747
        %v1749 = vpop.f32.mrf.mxu0
        %v1750 = vadd.f32 0.0, %v1749
        %1751 = vdwg.mxu0
        %v1752 = vadd.f32 %v868, %v1713
        %v1753 = vadd.f32 %v871, %v1715
        %v1754 = vadd.f32 %v874, %v1718
        %v1755 = vadd.f32 %v877, %v1720
        %v1756 = vadd.f32 %v880, %v1723
        %v1757 = vadd.f32 %v883, %v1725
        %v1758 = vadd.f32 %v886, %v1728
        %v1759 = vadd.f32 %v889, %v1730
        %v1760 = vadd.f32 %v892, %v1733
        %v1761 = vadd.f32 %v895, %v1735
        %v1762 = vadd.f32 %v898, %v1738
        %v1763 = vadd.f32 %v901, %v1740
        %v1764 = vadd.f32 %v904, %v1743
        %v1765 = vadd.f32 %v907, %v1745
        %v1766 = vadd.f32 %v910, %v1748
        %v1767 = vadd.f32 %v913, %v1750
        %v1768 = vld [vmem:[#allocation8] sm:$0xff]
        %v1769 = vld [vmem:[#allocation8 + $0x8] sm:$0xff]
        %v1770 = vld [vmem:[#allocation8 + $0x10] sm:$0xff]
        %v1771 = vld [vmem:[#allocation8 + $0x18] sm:$0xff]
        %v1772 = vld [vmem:[#allocation8 + $0x20] sm:$0xff]
        %v1773 = vld [vmem:[#allocation8 + $0x28] sm:$0xff]
        %v1774 = vld [vmem:[#allocation8 + $0x30] sm:$0xff]
        %v1775 = vld [vmem:[#allocation8 + $0x38] sm:$0xff]
        %v1776 = vld [vmem:[#allocation8 + $0x40] sm:$0xff]
        %v1777 = vld [vmem:[#allocation8 + $0x48] sm:$0xff]
        %v1778 = vld [vmem:[#allocation8 + $0x50] sm:$0xff]
        %v1779 = vld [vmem:[#allocation8 + $0x58] sm:$0xff]
        %v1780 = vld [vmem:[#allocation8 + $0x60] sm:$0xff]
        %v1781 = vld [vmem:[#allocation8 + $0x68] sm:$0xff]
        %v1782 = vld [vmem:[#allocation8 + $0x70] sm:$0xff]
        %v1783 = vld [vmem:[#allocation8 + $0x78] sm:$0xff]
        %v1784 = vld [vmem:[%s13] sm:$0x1]
        %v1786 = vperm.slane %v1784, 0
        %1788 = vmatpush.msra.mxu0 %v1783
        %1789 = vmatpush.msra.mxu0 %v1782
        %1790 = vmatpush.msra.mxu0 %v1781
        %1791 = vmatpush.msra.mxu0 %v1780
        %1792 = vmatpush.msra.mxu0 %v1779
        %1793 = vmatpush.msra.mxu0 %v1778
        %1794 = vmatpush.msra.mxu0 %v1777
        %1795 = vmatpush.msra.mxu0 %v1776
        %1796 = vmatpush.msra.mxu0 %v1775
        %1797 = vmatpush.msra.mxu0 %v1774
        %1798 = vmatpush.msra.mxu0 %v1773
        %1799 = vmatpush.msra.mxu0 %v1772
        %1800 = vmatpush.msra.mxu0 %v1771
        %1801 = vmatpush.msra.mxu0 %v1770
        %1802 = vmatpush.msra.mxu0 %v1769
        %1803 = vmatpush.msra.mxu0 %v1768
        %1804 = vmatmul.f32.gmra.mxu0 %v1261
        %v1805 = vpop.f32.mrf.mxu0
        %v1806 = vadd.f32 %v1786, %v1805
        %1807 = vmatmul.f32.gmra.mxu0 %v1263
        %v1808 = vpop.f32.mrf.mxu0
        %v1809 = vadd.f32 %v1786, %v1808
        %1810 = vmatmul.f32.gmra.mxu0 %v1265
        %v1811 = vpop.f32.mrf.mxu0
        %v1812 = vadd.f32 %v1786, %v1811
        %1813 = vmatmul.f32.gmra.mxu0 %v1267
        %v1814 = vpop.f32.mrf.mxu0
        %v1815 = vadd.f32 %v1786, %v1814
        %1816 = vmatmul.f32.gmra.mxu0 %v1269
        %v1817 = vpop.f32.mrf.mxu0
        %v1818 = vadd.f32 %v1786, %v1817
        %1819 = vmatmul.f32.gmra.mxu0 %v1271
        %v1820 = vpop.f32.mrf.mxu0
        %v1821 = vadd.f32 %v1786, %v1820
        %1822 = vmatmul.f32.gmra.mxu0 %v1273
        %v1823 = vpop.f32.mrf.mxu0
        %v1824 = vadd.f32 %v1786, %v1823
        %1825 = vmatmul.f32.gmra.mxu0 %v1275
        %v1826 = vpop.f32.mrf.mxu0
        %v1827 = vadd.f32 %v1786, %v1826
        %1828 = vmatmul.f32.gmra.mxu0 %v1277
        %v1829 = vpop.f32.mrf.mxu0
        %v1830 = vadd.f32 %v1786, %v1829
        %1831 = vmatmul.f32.gmra.mxu0 %v1279
        %v1832 = vpop.f32.mrf.mxu0
        %v1833 = vadd.f32 %v1786, %v1832
        %1834 = vmatmul.f32.gmra.mxu0 %v1281
        %v1835 = vpop.f32.mrf.mxu0
        %v1836 = vadd.f32 %v1786, %v1835
        %1837 = vmatmul.f32.gmra.mxu0 %v1283
        %v1838 = vpop.f32.mrf.mxu0
        %v1839 = vadd.f32 %v1786, %v1838
        %1840 = vmatmul.f32.gmra.mxu0 %v1285
        %v1841 = vpop.f32.mrf.mxu0
        %v1842 = vadd.f32 %v1786, %v1841
        %1843 = vmatmul.f32.gmra.mxu0 %v1287
        %v1844 = vpop.f32.mrf.mxu0
        %v1845 = vadd.f32 %v1786, %v1844
        %1846 = vmatmul.f32.gmra.mxu0 %v1289
        %v1847 = vpop.f32.mrf.mxu0
        %v1848 = vadd.f32 %v1786, %v1847
        %1849 = vmatmul.f32.gmra.mxu0 %v1291
        %v1850 = vpop.f32.mrf.mxu0
        %v1851 = vadd.f32 %v1786, %v1850
        %1852 = vdwg.mxu0
        %v1853 = vmax.f32 %v1806, 0.0
        %v1854 = vmax.f32 %v1809, 0.0
        %v1855 = vmax.f32 %v1812, 0.0
        %v1856 = vmax.f32 %v1815, 0.0
        %v1857 = vmax.f32 %v1818, 0.0
        %v1858 = vmax.f32 %v1821, 0.0
        %v1859 = vmax.f32 %v1824, 0.0
        %v1860 = vmax.f32 %v1827, 0.0
        %v1861 = vmax.f32 %v1830, 0.0
        %v1862 = vmax.f32 %v1833, 0.0
        %v1863 = vmax.f32 %v1836, 0.0
        %v1864 = vmax.f32 %v1839, 0.0
        %v1865 = vmax.f32 %v1842, 0.0
        %v1866 = vmax.f32 %v1845, 0.0
        %v1867 = vmax.f32 %v1848, 0.0
        %v1868 = vmax.f32 %v1851, 0.0
        %v1869 = vand.u32 2147483647, %v1806
        %v1870 = vand.u32 2147483647, %v1809
        %v1871 = vand.u32 2147483647, %v1812
        %v1872 = vand.u32 2147483647, %v1815
        %v1873 = vand.u32 2147483647, %v1818
        %v1874 = vand.u32 2147483647, %v1821
        %v1875 = vand.u32 2147483647, %v1824
        %v1876 = vand.u32 2147483647, %v1827
        %v1877 = vand.u32 2147483647, %v1830
        %v1878 = vand.u32 2147483647, %v1833
        %v1879 = vand.u32 2147483647, %v1836
        %v1880 = vand.u32 2147483647, %v1839
        %v1881 = vand.u32 2147483647, %v1842
        %v1882 = vand.u32 2147483647, %v1845
        %v1883 = vand.u32 2147483647, %v1848
        %v1884 = vand.u32 2147483647, %v1851
        %v1885 = vsub.f32 0.0, %v1869
        %v1886 = vsub.f32 0.0, %v1870
        %v1887 = vsub.f32 0.0, %v1871
        %v1888 = vsub.f32 0.0, %v1872
        %v1889 = vsub.f32 0.0, %v1873
        %v1890 = vsub.f32 0.0, %v1874
        %v1891 = vsub.f32 0.0, %v1875
        %v1892 = vsub.f32 0.0, %v1876
        %v1893 = vsub.f32 0.0, %v1877
        %v1894 = vsub.f32 0.0, %v1878
        %v1895 = vsub.f32 0.0, %v1879
        %v1896 = vsub.f32 0.0, %v1880
        %v1897 = vsub.f32 0.0, %v1881
        %v1898 = vsub.f32 0.0, %v1882
        %v1899 = vsub.f32 0.0, %v1883
        %v1900 = vsub.f32 0.0, %v1884
        %v1901 = vmul.f32 %v1885, 1.442695
        %v1902 = vpow.pop %v1901
        %v1903 = vmul.f32 %v1886, 1.442695
        %v1904 = vpow.pop %v1903
        %v1905 = vmul.f32 %v1887, 1.442695
        %v1906 = vpow.pop %v1905
        %v1907 = vmul.f32 %v1888, 1.442695
        %v1908 = vpow.pop %v1907
        %v1909 = vmul.f32 %v1889, 1.442695
        %v1910 = vpow.pop %v1909
        %v1911 = vmul.f32 %v1890, 1.442695
        %v1912 = vpow.pop %v1911
        %v1913 = vmul.f32 %v1891, 1.442695
        %v1914 = vpow.pop %v1913
        %v1915 = vmul.f32 %v1892, 1.442695
        %v1916 = vpow.pop %v1915
        %v1917 = vmul.f32 %v1893, 1.442695
        %v1918 = vpow.pop %v1917
        %v1919 = vmul.f32 %v1894, 1.442695
        %v1920 = vpow.pop %v1919
        %v1921 = vmul.f32 %v1895, 1.442695
        %v1922 = vpow.pop %v1921
        %v1923 = vmul.f32 %v1896, 1.442695
        %v1924 = vpow.pop %v1923
        %v1925 = vmul.f32 %v1897, 1.442695
        %v1926 = vpow.pop %v1925
        %v1927 = vmul.f32 %v1898, 1.442695
        %v1928 = vpow.pop %v1927
        %v1929 = vmul.f32 %v1899, 1.442695
        %v1930 = vpow.pop %v1929
        %v1931 = vmul.f32 %v1900, 1.442695
        %v1932 = vpow.pop %v1931
        %v1933 = vadd.f32 %v1902, 1.0
        %v1934 = vadd.f32 %v1904, 1.0
        %v1935 = vadd.f32 %v1906, 1.0
        %v1936 = vadd.f32 %v1908, 1.0
        %v1937 = vadd.f32 %v1910, 1.0
        %v1938 = vadd.f32 %v1912, 1.0
        %v1939 = vadd.f32 %v1914, 1.0
        %v1940 = vadd.f32 %v1916, 1.0
        %v1941 = vadd.f32 %v1918, 1.0
        %v1942 = vadd.f32 %v1920, 1.0
        %v1943 = vadd.f32 %v1922, 1.0
        %v1944 = vadd.f32 %v1924, 1.0
        %v1945 = vadd.f32 %v1926, 1.0
        %v1946 = vadd.f32 %v1928, 1.0
        %v1947 = vadd.f32 %v1930, 1.0
        %v1948 = vadd.f32 %v1932, 1.0
        %v1949 = vlog2.pop %v1933
        %v1950 = vmul.f32 %v1949, 0.6931472
        %v1951 = vlog2.pop %v1934
        %v1952 = vmul.f32 %v1951, 0.6931472
        %v1953 = vlog2.pop %v1935
        %v1954 = vmul.f32 %v1953, 0.6931472
        %v1955 = vlog2.pop %v1936
        %v1956 = vmul.f32 %v1955, 0.6931472
        %v1957 = vlog2.pop %v1937
        %v1958 = vmul.f32 %v1957, 0.6931472
        %v1959 = vlog2.pop %v1938
        %v1960 = vmul.f32 %v1959, 0.6931472
        %v1961 = vlog2.pop %v1939
        %v1962 = vmul.f32 %v1961, 0.6931472
        %v1963 = vlog2.pop %v1940
        %v1964 = vmul.f32 %v1963, 0.6931472
        %v1965 = vlog2.pop %v1941
        %v1966 = vmul.f32 %v1965, 0.6931472
        %v1967 = vlog2.pop %v1942
        %v1968 = vmul.f32 %v1967, 0.6931472
        %v1969 = vlog2.pop %v1943
        %v1970 = vmul.f32 %v1969, 0.6931472
        %v1971 = vlog2.pop %v1944
        %v1972 = vmul.f32 %v1971, 0.6931472
        %v1973 = vlog2.pop %v1945
        %v1974 = vmul.f32 %v1973, 0.6931472
        %v1975 = vlog2.pop %v1946
        %v1976 = vmul.f32 %v1975, 0.6931472
        %v1977 = vlog2.pop %v1947
        %v1978 = vmul.f32 %v1977, 0.6931472
        %v1979 = vlog2.pop %v1948
        %v1980 = vmul.f32 %v1979, 0.6931472
        %v1981 = vadd.f32 %v1853, %v1950
        %v1982 = vadd.f32 %v1854, %v1952
        %v1983 = vadd.f32 %v1855, %v1954
        %v1984 = vadd.f32 %v1856, %v1956
        %v1985 = vadd.f32 %v1857, %v1958
        %v1986 = vadd.f32 %v1858, %v1960
        %v1987 = vadd.f32 %v1859, %v1962
        %v1988 = vadd.f32 %v1860, %v1964
        %v1989 = vadd.f32 %v1861, %v1966
        %v1990 = vadd.f32 %v1862, %v1968
        %v1991 = vadd.f32 %v1863, %v1970
        %v1992 = vadd.f32 %v1864, %v1972
        %v1993 = vadd.f32 %v1865, %v1974
        %v1994 = vadd.f32 %v1866, %v1976
        %v1995 = vadd.f32 %v1867, %v1978
        %v1996 = vadd.f32 %v1868, %v1980
        %v1997 = vsub.f32 %v1981, 0.6931472
        %v1998 = vsub.f32 %v1982, 0.6931472
        %v1999 = vsub.f32 %v1983, 0.6931472
        %v2000 = vsub.f32 %v1984, 0.6931472
        %v2001 = vsub.f32 %v1985, 0.6931472
        %v2002 = vsub.f32 %v1986, 0.6931472
        %v2003 = vsub.f32 %v1987, 0.6931472
        %v2004 = vsub.f32 %v1988, 0.6931472
        %v2005 = vsub.f32 %v1989, 0.6931472
        %v2006 = vsub.f32 %v1990, 0.6931472
        %v2007 = vsub.f32 %v1991, 0.6931472
        %v2008 = vsub.f32 %v1992, 0.6931472
        %v2009 = vsub.f32 %v1993, 0.6931472
        %v2010 = vsub.f32 %v1994, 0.6931472
        %v2011 = vsub.f32 %v1995, 0.6931472
        %v2012 = vsub.f32 %v1996, 0.6931472
        %v2013 = vld [vmem:[#allocation10] sm:$0xff]
        %v2014 = vld [vmem:[#allocation10 + $0x8] sm:$0xff]
        %v2015 = vld [vmem:[#allocation10 + $0x10] sm:$0xff]
        %v2016 = vld [vmem:[#allocation10 + $0x18] sm:$0xff]
        %v2017 = vld [vmem:[#allocation10 + $0x20] sm:$0xff]
        %v2018 = vld [vmem:[#allocation10 + $0x28] sm:$0xff]
        %v2019 = vld [vmem:[#allocation10 + $0x30] sm:$0xff]
        %v2020 = vld [vmem:[#allocation10 + $0x38] sm:$0xff]
        %v2021 = vld [vmem:[#allocation10 + $0x40] sm:$0xff]
        %v2022 = vld [vmem:[#allocation10 + $0x48] sm:$0xff]
        %v2023 = vld [vmem:[#allocation10 + $0x50] sm:$0xff]
        %v2024 = vld [vmem:[#allocation10 + $0x58] sm:$0xff]
        %v2025 = vld [vmem:[#allocation10 + $0x60] sm:$0xff]
        %v2026 = vld [vmem:[#allocation10 + $0x68] sm:$0xff]
        %v2027 = vld [vmem:[#allocation10 + $0x70] sm:$0xff]
        %v2028 = vld [vmem:[#allocation10 + $0x78] sm:$0xff]
        %v2029 = vld [vmem:[%s15] sm:$0x1]
        %v2031 = vperm.slane %v2029, 0
        %2033 = vmatpush.msra.mxu0 %v2028
        %2034 = vmatpush.msra.mxu0 %v2027
        %2035 = vmatpush.msra.mxu0 %v2026
        %2036 = vmatpush.msra.mxu0 %v2025
        %2037 = vmatpush.msra.mxu0 %v2024
        %2038 = vmatpush.msra.mxu0 %v2023
        %2039 = vmatpush.msra.mxu0 %v2022
        %2040 = vmatpush.msra.mxu0 %v2021
        %2041 = vmatpush.msra.mxu0 %v2020
        %2042 = vmatpush.msra.mxu0 %v2019
        %2043 = vmatpush.msra.mxu0 %v2018
        %2044 = vmatpush.msra.mxu0 %v2017
        %2045 = vmatpush.msra.mxu0 %v2016
        %2046 = vmatpush.msra.mxu0 %v2015
        %2047 = vmatpush.msra.mxu0 %v2014
        %2048 = vmatpush.msra.mxu0 %v2013
        %2049 = vmatmul.f32.gmra.mxu0 %v1997
        %v2050 = vpop.f32.mrf.mxu0
        %v2051 = vadd.f32 %v2031, %v2050
        %2052 = vmatmul.f32.gmra.mxu0 %v1998
        %v2053 = vpop.f32.mrf.mxu0
        %v2054 = vadd.f32 %v2031, %v2053
        %2055 = vmatmul.f32.gmra.mxu0 %v1999
        %v2056 = vpop.f32.mrf.mxu0
        %v2057 = vadd.f32 %v2031, %v2056
        %2058 = vmatmul.f32.gmra.mxu0 %v2000
        %v2059 = vpop.f32.mrf.mxu0
        %v2060 = vadd.f32 %v2031, %v2059
        %2061 = vmatmul.f32.gmra.mxu0 %v2001
        %v2062 = vpop.f32.mrf.mxu0
        %v2063 = vadd.f32 %v2031, %v2062
        %2064 = vmatmul.f32.gmra.mxu0 %v2002
        %v2065 = vpop.f32.mrf.mxu0
        %v2066 = vadd.f32 %v2031, %v2065
        %2067 = vmatmul.f32.gmra.mxu0 %v2003
        %v2068 = vpop.f32.mrf.mxu0
        %v2069 = vadd.f32 %v2031, %v2068
        %2070 = vmatmul.f32.gmra.mxu0 %v2004
        %v2071 = vpop.f32.mrf.mxu0
        %v2072 = vadd.f32 %v2031, %v2071
        %2073 = vmatmul.f32.gmra.mxu0 %v2005
        %v2074 = vpop.f32.mrf.mxu0
        %v2075 = vadd.f32 %v2031, %v2074
        %2076 = vmatmul.f32.gmra.mxu0 %v2006
        %v2077 = vpop.f32.mrf.mxu0
        %v2078 = vadd.f32 %v2031, %v2077
        %2079 = vmatmul.f32.gmra.mxu0 %v2007
        %v2080 = vpop.f32.mrf.mxu0
        %v2081 = vadd.f32 %v2031, %v2080
        %2082 = vmatmul.f32.gmra.mxu0 %v2008
        %v2083 = vpop.f32.mrf.mxu0
        %v2084 = vadd.f32 %v2031, %v2083
        %2085 = vmatmul.f32.gmra.mxu0 %v2009
        %v2086 = vpop.f32.mrf.mxu0
        %v2087 = vadd.f32 %v2031, %v2086
        %2088 = vmatmul.f32.gmra.mxu0 %v2010
        %v2089 = vpop.f32.mrf.mxu0
        %v2090 = vadd.f32 %v2031, %v2089
        %2091 = vmatmul.f32.gmra.mxu0 %v2011
        %v2092 = vpop.f32.mrf.mxu0
        %v2093 = vadd.f32 %v2031, %v2092
        %2094 = vmatmul.f32.gmra.mxu0 %v2012
        %v2095 = vpop.f32.mrf.mxu0
        %v2096 = vadd.f32 %v2031, %v2095
        %2097 = vdwg.mxu0
        %v2098 = vpack.c.bf16 %v1753, %v1752
        %v2099 = vpack.c.bf16 %v1755, %v1754
        %v2100 = vpack.c.bf16 %v1757, %v1756
        %v2101 = vpack.c.bf16 %v1759, %v1758
        %v2102 = vpack.c.bf16 %v1761, %v1760
        %v2103 = vpack.c.bf16 %v1763, %v1762
        %v2104 = vpack.c.bf16 %v1765, %v1764
        %v2105 = vpack.c.bf16 %v1767, %v1766
        %2106 = vmatpush.bf16.msra.mxu0 %v2105
        %2107 = vmatpush.bf16.msra.mxu0 %v2104
        %2108 = vmatpush.bf16.msra.mxu0 %v2103
        %2109 = vmatpush.bf16.msra.mxu0 %v2102
        %2110 = vmatpush.bf16.msra.mxu0 %v2101
        %2111 = vmatpush.bf16.msra.mxu0 %v2100
        %2112 = vmatpush.bf16.msra.mxu0 %v2099
        %2113 = vmatpush.bf16.msra.mxu0 %v2098
        %2114 = vmatmul.bf16.gmra.mxu0 %v1029
        %v2115 = vpop.f32.mrf.mxu0
        %v2116 = vadd.f32 0.0, %v2115
        %v2117 = vpop.f32.mrf.mxu0
        %v2118 = vadd.f32 0.0, %v2117
        %2119 = vmatmul.bf16.gmra.mxu0 %v1030
        %v2120 = vpop.f32.mrf.mxu0
        %v2121 = vadd.f32 0.0, %v2120
        %v2122 = vpop.f32.mrf.mxu0
        %v2123 = vadd.f32 0.0, %v2122
        %2124 = vmatmul.bf16.gmra.mxu0 %v1031
        %v2125 = vpop.f32.mrf.mxu0
        %v2126 = vadd.f32 0.0, %v2125
        %v2127 = vpop.f32.mrf.mxu0
        %v2128 = vadd.f32 0.0, %v2127
        %2129 = vmatmul.bf16.gmra.mxu0 %v1032
        %v2130 = vpop.f32.mrf.mxu0
        %v2131 = vadd.f32 0.0, %v2130
        %v2132 = vpop.f32.mrf.mxu0
        %v2133 = vadd.f32 0.0, %v2132
        %2134 = vmatmul.bf16.gmra.mxu0 %v1033
        %v2135 = vpop.f32.mrf.mxu0
        %v2136 = vadd.f32 0.0, %v2135
        %v2137 = vpop.f32.mrf.mxu0
        %v2138 = vadd.f32 0.0, %v2137
        %2139 = vmatmul.bf16.gmra.mxu0 %v1034
        %v2140 = vpop.f32.mrf.mxu0
        %v2141 = vadd.f32 0.0, %v2140
        %v2142 = vpop.f32.mrf.mxu0
        %v2143 = vadd.f32 0.0, %v2142
        %2144 = vmatmul.bf16.gmra.mxu0 %v1035
        %v2145 = vpop.f32.mrf.mxu0
        %v2146 = vadd.f32 0.0, %v2145
        %v2147 = vpop.f32.mrf.mxu0
        %v2148 = vadd.f32 0.0, %v2147
        %2149 = vmatmul.bf16.gmra.mxu0 %v1036
        %v2150 = vpop.f32.mrf.mxu0
        %v2151 = vadd.f32 0.0, %v2150
        %v2152 = vpop.f32.mrf.mxu0
        %v2153 = vadd.f32 0.0, %v2152
        %2154 = vdwg.mxu0
        %v2155 = vmul.f32 %v2116, %v2051
        %v2156 = vmul.f32 %v2118, %v2054
        %v2157 = vmul.f32 %v2121, %v2057
        %v2158 = vmul.f32 %v2123, %v2060
        %v2159 = vmul.f32 %v2126, %v2063
        %v2160 = vmul.f32 %v2128, %v2066
        %v2161 = vmul.f32 %v2131, %v2069
        %v2162 = vmul.f32 %v2133, %v2072
        %v2163 = vmul.f32 %v2136, %v2075
        %v2164 = vmul.f32 %v2138, %v2078
        %v2165 = vmul.f32 %v2141, %v2081
        %v2166 = vmul.f32 %v2143, %v2084
        %v2167 = vmul.f32 %v2146, %v2087
        %v2168 = vmul.f32 %v2148, %v2090
        %v2169 = vmul.f32 %v2151, %v2093
        %v2170 = vmul.f32 %v2153, %v2096
        %v2171 = vpack.c.bf16 %v2156, %v2155
        %v2172 = vpack.c.bf16 %v2158, %v2157
        %v2173 = vpack.c.bf16 %v2160, %v2159
        %v2174 = vpack.c.bf16 %v2162, %v2161
        %v2175 = vpack.c.bf16 %v2164, %v2163
        %v2176 = vpack.c.bf16 %v2166, %v2165
        %v2177 = vpack.c.bf16 %v2168, %v2167
        %v2178 = vpack.c.bf16 %v2170, %v2169
        %2179 = vmatpush.bf16.msra.mxu0 %v2178
        %2180 = vmatpush.bf16.msra.mxu0 %v2177
        %2181 = vmatpush.bf16.msra.mxu0 %v2176
        %2182 = vmatpush.bf16.msra.mxu0 %v2175
        %2183 = vmatpush.bf16.msra.mxu0 %v2174
        %2184 = vmatpush.bf16.msra.mxu0 %v2173
        %2185 = vmatpush.bf16.msra.mxu0 %v2172
        %2186 = vmatpush.bf16.msra.mxu0 %v2171
        %2187 = vmatmul.bf16.gmra.mxu0 %v1104
        %v2188 = vpop.f32.mrf.mxu0
        %v2189 = vadd.f32 0.0, %v2188
        %v2190 = vpop.f32.mrf.mxu0
        %v2191 = vadd.f32 0.0, %v2190
        %2192 = vmatmul.bf16.gmra.mxu0 %v1105
        %v2193 = vpop.f32.mrf.mxu0
        %v2194 = vadd.f32 0.0, %v2193
        %v2195 = vpop.f32.mrf.mxu0
        %v2196 = vadd.f32 0.0, %v2195
        %2197 = vmatmul.bf16.gmra.mxu0 %v1106
        %v2198 = vpop.f32.mrf.mxu0
        %v2199 = vadd.f32 0.0, %v2198
        %v2200 = vpop.f32.mrf.mxu0
        %v2201 = vadd.f32 0.0, %v2200
        %2202 = vmatmul.bf16.gmra.mxu0 %v1107
        %v2203 = vpop.f32.mrf.mxu0
        %v2204 = vadd.f32 0.0, %v2203
        %v2205 = vpop.f32.mrf.mxu0
        %v2206 = vadd.f32 0.0, %v2205
        %2207 = vmatmul.bf16.gmra.mxu0 %v1108
        %v2208 = vpop.f32.mrf.mxu0
        %v2209 = vadd.f32 0.0, %v2208
        %v2210 = vpop.f32.mrf.mxu0
        %v2211 = vadd.f32 0.0, %v2210
        %2212 = vmatmul.bf16.gmra.mxu0 %v1109
        %v2213 = vpop.f32.mrf.mxu0
        %v2214 = vadd.f32 0.0, %v2213
        %v2215 = vpop.f32.mrf.mxu0
        %v2216 = vadd.f32 0.0, %v2215
        %2217 = vmatmul.bf16.gmra.mxu0 %v1110
        %v2218 = vpop.f32.mrf.mxu0
        %v2219 = vadd.f32 0.0, %v2218
        %v2220 = vpop.f32.mrf.mxu0
        %v2221 = vadd.f32 0.0, %v2220
        %2222 = vmatmul.bf16.gmra.mxu0 %v1111
        %v2223 = vpop.f32.mrf.mxu0
        %v2224 = vadd.f32 0.0, %v2223
        %v2225 = vpop.f32.mrf.mxu0
        %v2226 = vadd.f32 0.0, %v2225
        %2227 = vdwg.mxu0
        %v2228 = vadd.f32 %v1752, %v2189
        %v2229 = vadd.f32 %v1753, %v2191
        %v2230 = vadd.f32 %v1754, %v2194
        %v2231 = vadd.f32 %v1755, %v2196
        %v2232 = vadd.f32 %v1756, %v2199
        %v2233 = vadd.f32 %v1757, %v2201
        %v2234 = vadd.f32 %v1758, %v2204
        %v2235 = vadd.f32 %v1759, %v2206
        %v2236 = vadd.f32 %v1760, %v2209
        %v2237 = vadd.f32 %v1761, %v2211
        %v2238 = vadd.f32 %v1762, %v2214
        %v2239 = vadd.f32 %v1763, %v2216
        %v2240 = vadd.f32 %v1764, %v2219
        %v2241 = vadd.f32 %v1765, %v2221
        %v2242 = vadd.f32 %v1766, %v2224
        %v2243 = vadd.f32 %v1767, %v2226
        %v2244 = vld [vmem:[#allocation11] sm:$0xff]
        %v2245 = vld [vmem:[#allocation11 + $0x8] sm:$0xff]
        %v2246 = vld [vmem:[#allocation11 + $0x10] sm:$0xff]
        %v2247 = vld [vmem:[#allocation11 + $0x18] sm:$0xff]
        %v2248 = vld [vmem:[#allocation11 + $0x20] sm:$0xff]
        %v2249 = vld [vmem:[#allocation11 + $0x28] sm:$0xff]
        %v2250 = vld [vmem:[#allocation11 + $0x30] sm:$0xff]
        %v2251 = vld [vmem:[#allocation11 + $0x38] sm:$0xff]
        %v2252 = vld [vmem:[#allocation11 + $0x40] sm:$0xff]
        %v2253 = vld [vmem:[#allocation11 + $0x48] sm:$0xff]
        %v2254 = vld [vmem:[#allocation11 + $0x50] sm:$0xff]
        %v2255 = vld [vmem:[#allocation11 + $0x58] sm:$0xff]
        %v2256 = vld [vmem:[#allocation11 + $0x60] sm:$0xff]
        %v2257 = vld [vmem:[#allocation11 + $0x68] sm:$0xff]
        %v2258 = vld [vmem:[#allocation11 + $0x70] sm:$0xff]
        %v2259 = vld [vmem:[#allocation11 + $0x78] sm:$0xff]
        %v2260 = vld [vmem:[%s17] sm:$0x1]
        %v2262 = vperm.slane %v2260, 0
        %2264 = vmatpush.msra.mxu0 %v2259
        %2265 = vmatpush.msra.mxu0 %v2258
        %2266 = vmatpush.msra.mxu0 %v2257
        %2267 = vmatpush.msra.mxu0 %v2256
        %2268 = vmatpush.msra.mxu0 %v2255
        %2269 = vmatpush.msra.mxu0 %v2254
        %2270 = vmatpush.msra.mxu0 %v2253
        %2271 = vmatpush.msra.mxu0 %v2252
        %2272 = vmatpush.msra.mxu0 %v2251
        %2273 = vmatpush.msra.mxu0 %v2250
        %2274 = vmatpush.msra.mxu0 %v2249
        %2275 = vmatpush.msra.mxu0 %v2248
        %2276 = vmatpush.msra.mxu0 %v2247
        %2277 = vmatpush.msra.mxu0 %v2246
        %2278 = vmatpush.msra.mxu0 %v2245
        %2279 = vmatpush.msra.mxu0 %v2244
        %2280 = vmatmul.f32.gmra.mxu0 %v2228
        %v2281 = vpop.f32.mrf.mxu0
        %v2282 = vadd.f32 %v2262, %v2281
        %2283 = vmatmul.f32.gmra.mxu0 %v2229
        %v2284 = vpop.f32.mrf.mxu0
        %v2285 = vadd.f32 %v2262, %v2284
        %2286 = vmatmul.f32.gmra.mxu0 %v2230
        %v2287 = vpop.f32.mrf.mxu0
        %v2288 = vadd.f32 %v2262, %v2287
        %2289 = vmatmul.f32.gmra.mxu0 %v2231
        %v2290 = vpop.f32.mrf.mxu0
        %v2291 = vadd.f32 %v2262, %v2290
        %2292 = vmatmul.f32.gmra.mxu0 %v2232
        %v2293 = vpop.f32.mrf.mxu0
        %v2294 = vadd.f32 %v2262, %v2293
        %2295 = vmatmul.f32.gmra.mxu0 %v2233
        %v2296 = vpop.f32.mrf.mxu0
        %v2297 = vadd.f32 %v2262, %v2296
        %2298 = vmatmul.f32.gmra.mxu0 %v2234
        %v2299 = vpop.f32.mrf.mxu0
        %v2300 = vadd.f32 %v2262, %v2299
        %2301 = vmatmul.f32.gmra.mxu0 %v2235
        %v2302 = vpop.f32.mrf.mxu0
        %v2303 = vadd.f32 %v2262, %v2302
        %2304 = vmatmul.f32.gmra.mxu0 %v2236
        %v2305 = vpop.f32.mrf.mxu0
        %v2306 = vadd.f32 %v2262, %v2305
        %2307 = vmatmul.f32.gmra.mxu0 %v2237
        %v2308 = vpop.f32.mrf.mxu0
        %v2309 = vadd.f32 %v2262, %v2308
        %2310 = vmatmul.f32.gmra.mxu0 %v2238
        %v2311 = vpop.f32.mrf.mxu0
        %v2312 = vadd.f32 %v2262, %v2311
        %2313 = vmatmul.f32.gmra.mxu0 %v2239
        %v2314 = vpop.f32.mrf.mxu0
        %v2315 = vadd.f32 %v2262, %v2314
        %2316 = vmatmul.f32.gmra.mxu0 %v2240
        %v2317 = vpop.f32.mrf.mxu0
        %v2318 = vadd.f32 %v2262, %v2317
        %2319 = vmatmul.f32.gmra.mxu0 %v2241
        %v2320 = vpop.f32.mrf.mxu0
        %v2321 = vadd.f32 %v2262, %v2320
        %2322 = vmatmul.f32.gmra.mxu0 %v2242
        %v2323 = vpop.f32.mrf.mxu0
        %v2324 = vadd.f32 %v2262, %v2323
        %2325 = vmatmul.f32.gmra.mxu0 %v2243
        %v2326 = vpop.f32.mrf.mxu0
        %v2327 = vadd.f32 %v2262, %v2326
        %2328 = vdwg.mxu0
        %v2329 = vmax.f32 %v2282, 0.0
        %v2330 = vmax.f32 %v2285, 0.0
        %v2331 = vmax.f32 %v2288, 0.0
        %v2332 = vmax.f32 %v2291, 0.0
        %v2333 = vmax.f32 %v2294, 0.0
        %v2334 = vmax.f32 %v2297, 0.0
        %v2335 = vmax.f32 %v2300, 0.0
        %v2336 = vmax.f32 %v2303, 0.0
        %v2337 = vmax.f32 %v2306, 0.0
        %v2338 = vmax.f32 %v2309, 0.0
        %v2339 = vmax.f32 %v2312, 0.0
        %v2340 = vmax.f32 %v2315, 0.0
        %v2341 = vmax.f32 %v2318, 0.0
        %v2342 = vmax.f32 %v2321, 0.0
        %v2343 = vmax.f32 %v2324, 0.0
        %v2344 = vmax.f32 %v2327, 0.0
        %v2345 = vand.u32 2147483647, %v2282
        %v2346 = vand.u32 2147483647, %v2285
        %v2347 = vand.u32 2147483647, %v2288
        %v2348 = vand.u32 2147483647, %v2291
        %v2349 = vand.u32 2147483647, %v2294
        %v2350 = vand.u32 2147483647, %v2297
        %v2351 = vand.u32 2147483647, %v2300
        %v2352 = vand.u32 2147483647, %v2303
        %v2353 = vand.u32 2147483647, %v2306
        %v2354 = vand.u32 2147483647, %v2309
        %v2355 = vand.u32 2147483647, %v2312
        %v2356 = vand.u32 2147483647, %v2315
        %v2357 = vand.u32 2147483647, %v2318
        %v2358 = vand.u32 2147483647, %v2321
        %v2359 = vand.u32 2147483647, %v2324
        %v2360 = vand.u32 2147483647, %v2327
        %v2361 = vsub.f32 0.0, %v2345
        %v2362 = vsub.f32 0.0, %v2346
        %v2363 = vsub.f32 0.0, %v2347
        %v2364 = vsub.f32 0.0, %v2348
        %v2365 = vsub.f32 0.0, %v2349
        %v2366 = vsub.f32 0.0, %v2350
        %v2367 = vsub.f32 0.0, %v2351
        %v2368 = vsub.f32 0.0, %v2352
        %v2369 = vsub.f32 0.0, %v2353
        %v2370 = vsub.f32 0.0, %v2354
        %v2371 = vsub.f32 0.0, %v2355
        %v2372 = vsub.f32 0.0, %v2356
        %v2373 = vsub.f32 0.0, %v2357
        %v2374 = vsub.f32 0.0, %v2358
        %v2375 = vsub.f32 0.0, %v2359
        %v2376 = vsub.f32 0.0, %v2360
        %v2377 = vmul.f32 %v2361, 1.442695
        %v2378 = vpow.pop %v2377
        %v2379 = vmul.f32 %v2362, 1.442695
        %v2380 = vpow.pop %v2379
        %v2381 = vmul.f32 %v2363, 1.442695
        %v2382 = vpow.pop %v2381
        %v2383 = vmul.f32 %v2364, 1.442695
        %v2384 = vpow.pop %v2383
        %v2385 = vmul.f32 %v2365, 1.442695
        %v2386 = vpow.pop %v2385
        %v2387 = vmul.f32 %v2366, 1.442695
        %v2388 = vpow.pop %v2387
        %v2389 = vmul.f32 %v2367, 1.442695
        %v2390 = vpow.pop %v2389
        %v2391 = vmul.f32 %v2368, 1.442695
        %v2392 = vpow.pop %v2391
        %v2393 = vmul.f32 %v2369, 1.442695
        %v2394 = vpow.pop %v2393
        %v2395 = vmul.f32 %v2370, 1.442695
        %v2396 = vpow.pop %v2395
        %v2397 = vmul.f32 %v2371, 1.442695
        %v2398 = vpow.pop %v2397
        %v2399 = vmul.f32 %v2372, 1.442695
        %v2400 = vpow.pop %v2399
        %v2401 = vmul.f32 %v2373, 1.442695
        %v2402 = vpow.pop %v2401
        %v2403 = vmul.f32 %v2374, 1.442695
        %v2404 = vpow.pop %v2403
        %v2405 = vmul.f32 %v2375, 1.442695
        %v2406 = vpow.pop %v2405
        %v2407 = vmul.f32 %v2376, 1.442695
        %v2408 = vpow.pop %v2407
        %v2409 = vadd.f32 %v2378, 1.0
        %v2410 = vadd.f32 %v2380, 1.0
        %v2411 = vadd.f32 %v2382, 1.0
        %v2412 = vadd.f32 %v2384, 1.0
        %v2413 = vadd.f32 %v2386, 1.0
        %v2414 = vadd.f32 %v2388, 1.0
        %v2415 = vadd.f32 %v2390, 1.0
        %v2416 = vadd.f32 %v2392, 1.0
        %v2417 = vadd.f32 %v2394, 1.0
        %v2418 = vadd.f32 %v2396, 1.0
        %v2419 = vadd.f32 %v2398, 1.0
        %v2420 = vadd.f32 %v2400, 1.0
        %v2421 = vadd.f32 %v2402, 1.0
        %v2422 = vadd.f32 %v2404, 1.0
        %v2423 = vadd.f32 %v2406, 1.0
        %v2424 = vadd.f32 %v2408, 1.0
        %v2425 = vlog2.pop %v2409
        %v2426 = vmul.f32 %v2425, 0.6931472
        %v2427 = vlog2.pop %v2410
        %v2428 = vmul.f32 %v2427, 0.6931472
        %v2429 = vlog2.pop %v2411
        %v2430 = vmul.f32 %v2429, 0.6931472
        %v2431 = vlog2.pop %v2412
        %v2432 = vmul.f32 %v2431, 0.6931472
        %v2433 = vlog2.pop %v2413
        %v2434 = vmul.f32 %v2433, 0.6931472
        %v2435 = vlog2.pop %v2414
        %v2436 = vmul.f32 %v2435, 0.6931472
        %v2437 = vlog2.pop %v2415
        %v2438 = vmul.f32 %v2437, 0.6931472
        %v2439 = vlog2.pop %v2416
        %v2440 = vmul.f32 %v2439, 0.6931472
        %v2441 = vlog2.pop %v2417
        %v2442 = vmul.f32 %v2441, 0.6931472
        %v2443 = vlog2.pop %v2418
        %v2444 = vmul.f32 %v2443, 0.6931472
        %v2445 = vlog2.pop %v2419
        %v2446 = vmul.f32 %v2445, 0.6931472
        %v2447 = vlog2.pop %v2420
        %v2448 = vmul.f32 %v2447, 0.6931472
        %v2449 = vlog2.pop %v2421
        %v2450 = vmul.f32 %v2449, 0.6931472
        %v2451 = vlog2.pop %v2422
        %v2452 = vmul.f32 %v2451, 0.6931472
        %v2453 = vlog2.pop %v2423
        %v2454 = vmul.f32 %v2453, 0.6931472
        %v2455 = vlog2.pop %v2424
        %v2456 = vmul.f32 %v2455, 0.6931472
        %v2457 = vadd.f32 %v2329, %v2426
        %v2458 = vadd.f32 %v2330, %v2428
        %v2459 = vadd.f32 %v2331, %v2430
        %v2460 = vadd.f32 %v2332, %v2432
        %v2461 = vadd.f32 %v2333, %v2434
        %v2462 = vadd.f32 %v2334, %v2436
        %v2463 = vadd.f32 %v2335, %v2438
        %v2464 = vadd.f32 %v2336, %v2440
        %v2465 = vadd.f32 %v2337, %v2442
        %v2466 = vadd.f32 %v2338, %v2444
        %v2467 = vadd.f32 %v2339, %v2446
        %v2468 = vadd.f32 %v2340, %v2448
        %v2469 = vadd.f32 %v2341, %v2450
        %v2470 = vadd.f32 %v2342, %v2452
        %v2471 = vadd.f32 %v2343, %v2454
        %v2472 = vadd.f32 %v2344, %v2456
        %v2473 = vsub.f32 %v2457, 0.6931472
        %v2474 = vsub.f32 %v2458, 0.6931472
        %v2475 = vsub.f32 %v2459, 0.6931472
        %v2476 = vsub.f32 %v2460, 0.6931472
        %v2477 = vsub.f32 %v2461, 0.6931472
        %v2478 = vsub.f32 %v2462, 0.6931472
        %v2479 = vsub.f32 %v2463, 0.6931472
        %v2480 = vsub.f32 %v2464, 0.6931472
        %v2481 = vsub.f32 %v2465, 0.6931472
        %v2482 = vsub.f32 %v2466, 0.6931472
        %v2483 = vsub.f32 %v2467, 0.6931472
        %v2484 = vsub.f32 %v2468, 0.6931472
        %v2485 = vsub.f32 %v2469, 0.6931472
        %v2486 = vsub.f32 %v2470, 0.6931472
        %v2487 = vsub.f32 %v2471, 0.6931472
        %v2488 = vsub.f32 %v2472, 0.6931472
        %v2489 = vld [vmem:[%s691] sm:$0x1]
        %v2490 = vperm.slane %v2489, 0
        %vm2491 = vcmp.eq.s32.totalorder %v2490, %v1039
        %v2492 = vsel %vm2491, 1, 0
        %v2493 = vcvt.s32.f32 %v2492
        %v2494 = vpack.c.bf16 %v2493, %v2493
        %v2495 = vunpack.c.l.bf16 %v2494
        %2496 = vadd.xlane.f32.xlu0 %v2495
        %v2497 = vpop.xlane.xlu0 %2496
        %v2498 = vpack.c.bf16 %v2474, %v2473
        %v2499 = vpack.c.bf16 %v2476, %v2475
        %v2500 = vpack.c.bf16 %v2478, %v2477
        %v2501 = vpack.c.bf16 %v2480, %v2479
        %v2502 = vpack.c.bf16 %v2482, %v2481
        %v2503 = vpack.c.bf16 %v2484, %v2483
        %v2504 = vpack.c.bf16 %v2486, %v2485
        %v2505 = vpack.c.bf16 %v2488, %v2487
        %2506 = vmatpush.bf16.msra.mxu0 %v2505
        %2507 = vmatpush.bf16.msra.mxu0 %v2504
        %2508 = vmatpush.bf16.msra.mxu0 %v2503
        %2509 = vmatpush.bf16.msra.mxu0 %v2502
        %2510 = vmatpush.bf16.msra.mxu0 %v2501
        %2511 = vmatpush.bf16.msra.mxu0 %v2500
        %2512 = vmatpush.bf16.msra.mxu0 %v2499
        %2513 = vmatpush.bf16.msra.mxu0 %v2498
        %2514 = vmatmul.bf16.gmra.mxu0 %v2494
        %v2515 = vpop.f32.mrf.mxu0
        %v2516 = vadd.f32 0.0, %v2515
        %v2517 = vpop.f32.mrf.mxu0
        %2518 = vdwg.mxu0
        %v2519 = vld [vmem:[#allocation13] sm:$0xff]
        %v2520 = vld [vmem:[#allocation13 + $0x8] sm:$0xff]
        %v2521 = vld [vmem:[#allocation13 + $0x10] sm:$0xff]
        %v2522 = vld [vmem:[#allocation13 + $0x18] sm:$0xff]
        %v2523 = vld [vmem:[#allocation13 + $0x20] sm:$0xff]
        %v2524 = vld [vmem:[#allocation13 + $0x28] sm:$0xff]
        %v2525 = vld [vmem:[#allocation13 + $0x30] sm:$0xff]
        %v2526 = vld [vmem:[#allocation13 + $0x38] sm:$0xff]
        %v2527 = vld [vmem:[#allocation13 + $0x40] sm:$0xff]
        %v2528 = vld [vmem:[#allocation13 + $0x48] sm:$0xff]
        %v2529 = vld [vmem:[#allocation13 + $0x50] sm:$0xff]
        %v2530 = vld [vmem:[#allocation13 + $0x58] sm:$0xff]
        %v2531 = vld [vmem:[#allocation13 + $0x60] sm:$0xff]
        %v2532 = vld [vmem:[#allocation13 + $0x68] sm:$0xff]
        %v2533 = vld [vmem:[#allocation13 + $0x70] sm:$0xff]
        %v2534 = vld [vmem:[#allocation13 + $0x78] sm:$0xff]
        %v2535 = vld [vmem:[%s19] sm:$0x1]
        %v2537 = vperm.slane %v2535, 0
        %v2539 = vmul.f32 %v2497, %v2537
        %2540 = vmatpush.msra.mxu0 %v2534
        %2541 = vmatpush.msra.mxu0 %v2533
        %2542 = vmatpush.msra.mxu0 %v2532
        %2543 = vmatpush.msra.mxu0 %v2531
        %2544 = vmatpush.msra.mxu0 %v2530
        %2545 = vmatpush.msra.mxu0 %v2529
        %2546 = vmatpush.msra.mxu0 %v2528
        %2547 = vmatpush.msra.mxu0 %v2527
        %2548 = vmatpush.msra.mxu0 %v2526
        %2549 = vmatpush.msra.mxu0 %v2525
        %2550 = vmatpush.msra.mxu0 %v2524
        %2551 = vmatpush.msra.mxu0 %v2523
        %2552 = vmatpush.msra.mxu0 %v2522
        %2553 = vmatpush.msra.mxu0 %v2521
        %2554 = vmatpush.msra.mxu0 %v2520
        %2555 = vmatpush.msra.mxu0 %v2519
        %2556 = vmatmul.f32.gmra.mxu0 %v2516
        %v2557 = vpop.f32.mrf.mxu0
        %v2558 = vadd.f32 %v2539, %v2557
        %2559 = vdwg.mxu0
        %2560 = vst [vmem:[%s795] sm:$0xff] %v2558
        %s2561 = sand.u32 %s493, 1
        %s2562 = scalar_lea.sflag [#allocation4], %s2561
        %s2563 = sand.u32 %s493, 1
        %s2564 = smul.addr %s2563, 8
        %s2565 = scalar_lea.vmem [#allocation14], %s2564
        // Predicated region
        $region129: #{tpu_custom_call.1} parent=99 // pred_check
          %p2566 = pneg %p503
        $region130: #{tpu_custom_call.1} parent=99 // pred_check_branch
          %2568 = sbr.rel (%p2566) target = $region132
        $region131: #{tpu_custom_call.1} parent=99 // pred_region
          %2570 = vsyncadd %s2562, 0
          %s2571 = smul.addr %s40, 8
          %s2572 = scalar_lea.hbm %s20, %s2571
          %s2574 = sshll.u32 %s2565, 4
          %s2575 = int_to_ptr.vmem [resolvable:$true] %s2574
          %s2576 = sshll.u32 %s2572, 4
          %s2577 = int_to_ptr.hbm [resolvable:$true] %s2576
          %2579 = dma.vmem_to_hbm [thread:$0]  %s2575, 128, %s2577, %s2562
        $region132: #{tpu_custom_call.1} parent=99 // pred_fallthru
          _
      $region100: #{tpu_custom_call.1} parent=5 // pred_fallthru
        _
      %p2580 = scmp.le.s32.totalorder 2, %s35
      // Predicated region
      $region133: #{tpu_custom_call.1} parent=5 // pred_check
        %p2581 = pneg %p2580
      $region134: #{tpu_custom_call.1} parent=5 // pred_check_branch
        %2583 = sbr.rel (%p2581) target = $region136
      $region135: #{tpu_custom_call.1} parent=5 // pred_region
        %s2584 = ssub.s32 %s35, 2
        // Predicated region
        $region137: #{tpu_custom_call.1} parent=135 // pred_check
          %p2585 = pneg %p509
        $region138: #{tpu_custom_call.1} parent=135 // pred_check_branch
          %2587 = sbr.rel (%p2585) target = $region140
        $region139: #{tpu_custom_call.1} parent=135 // pred_region
          %s2588 = sand.u32 %s494, 1
          %s2589 = scalar_lea.sflag [#allocation4], %s2588
          %s2590 = sand.u32 %s494, 1
          %s2591 = smul.addr %s2590, 8
          %s2592 = scalar_lea.vmem [#allocation14], %s2591
          %2594 = dma.done %s2589, 128
        $region140: #{tpu_custom_call.1} parent=135 // pred_fallthru
          _
      $region136: #{tpu_custom_call.1} parent=5 // pred_fallthru
        _
    $region6: #{tpu_custom_call.1} parent=1 // loop_footer
      %s39 = sadd.s32 1, %s35
    $region7: #{tpu_custom_call.1} parent=1 // loop_footer_branch
      %34 = sbr.rel target = $region3
    $region8: #{tpu_custom_call.1} parent=1 // loop_exit
      _
    %2595 = vsyncpa [#allocation3], 1
    %s2596 = scalar_lea.sflag [#allocation3], 1
    %2597 = vsyncpa %s2596, 1
    %2598 = vsyncpa [#allocation6], 1
    %2599 = vsyncpa [#allocation9], 1
    %2600 = vsyncpa [#allocation12], 1
    %2601 = vsyncpa [#allocation4], 1
    %s2602 = scalar_lea.sflag [#allocation4], 1
    %2603 = vsyncpa %s2602, 1

</llo_original>
